<compile_context>
chip_gen: v5e
topology: v5e:2x2
jax: 0.10.0
libtpu: 0.0.40
codegen_flags: <defaults>
</compile_context>

<pallas_src>
import jax
import jax.numpy as jnp
from jax.experimental import pallas as pl
from jax.experimental.pallas import tpu as pltpu

_LANE = 128
_SUBLANE = 8
_N1 = 1024   # FC1 out
_N2 = 512    # FC2 out


def _round_up(x, m):
    return ((x + m - 1) // m) * m


def _vmem_budget_bytes():
    """Generation-aware VMEM budget (half of per-core capacity, safe fallback)."""
    try:
        info = pltpu.get_tpu_info()
        cap = getattr(info, "vmem_capacity_bytes", None)
        if cap:
            return int(cap) // 2
    except Exception:
        pass
    return 32 << 20  # conservative: half of v7x's 64 MiB per TensorCore


def _pick_tk(d_in_pad, budget_bytes):
    """Largest K-tile (multiple of 128, divisor of d_in_pad) whose double-buffered
    bf16 (tk, 1024) w1 slabs use <= ~1/4 of the VMEM budget."""
    cap = max(_LANE, (budget_bytes // 4) // (2 * _N1 * 2))
    cap = (cap // _LANE) * _LANE
    tk = min(d_in_pad, cap)
    while d_in_pad % tk != 0:
        tk -= _LANE
    return tk


def _pick_tb(b_pad):
    """Batch tile: keep the whole (small) batch resident, cap at 256 rows so the
    f32 h1 accumulator + bf16 x tiles stay a small fraction of VMEM."""
    return min(b_pad, 256)


def pointnet_head_kernel(x_ref, w1_ref, b1_ref, w2_ref, b2_ref, wh_ref, bh_ref,
                         head_ref, h1_acc):
    k = pl.program_id(1)

    @pl.when(k == 0)
    def _init():
        h1_acc[...] = jnp.zeros_like(h1_acc)

    # Partial FC1: accumulate x_k @ w1_k into the f32 scratch (bf16 MXU inputs).
    h1_acc[...] += jnp.dot(x_ref[...], w1_ref[...],
                           preferred_element_type=jnp.float32)

    @pl.when(k == pl.num_programs(1) - 1)
    def _finalize():
        # f32 epilogues (bias + ReLU); only MXU operands are bf16.
        h1 = jnp.maximum(h1_acc[...] + b1_ref[...], 0.0)
        h2 = jnp.dot(h1.astype(w2_ref.dtype), w2_ref[...],
                     preferred_element_type=jnp.float32) + b2_ref[...]
        h2 = jnp.maximum(h2, 0.0)
        # Fused transl|rot head -> one lane-dense (tb, 128) store.
        head_ref[...] = (
            jnp.dot(h2.astype(wh_ref.dtype), wh_ref[...],
                    preferred_element_type=jnp.float32) + bh_ref[...])


def pointnet_head_forward(x, params, compute_transl=True, compute_rotation=True):
    """x: [B, ...] arbitrary trailing dims, flattened like x.view(B, -1)."""
    if not (compute_transl or compute_rotation):
        return None, None

    w1, b1, w2, b2, wt, bt, wr, br = params
    B = x.shape[0]
    x2d = x.reshape(B, -1).astype(jnp.float32)
    d_in = x2d.shape[1]
    n_rot = wr.shape[1]
    n1 = w1.shape[1]   # 1024
    n2 = w2.shape[1]   # 512

    # --- tiling choices -------------------------------------------------------
    budget = _vmem_budget_bytes()
    d_in_pad = _round_up(d_in, _LANE)
    tk = _pick_tk(d_in_pad, budget)
    n_k = d_in_pad // tk

    b_pad0 = _round_up(B, _SUBLANE)
    tb = _pick_tb(b_pad0)
    B_pad = _round_up(b_pad0, tb)
    n_b = B_pad // tb

    # --- pad / fuse operands (zero rows/cols change nothing numerically) -----
    x_p = jnp.pad(x2d, ((0, B_pad - B), (0, d_in_pad - d_in)))
    w1_p = jnp.pad(w1, ((0, d_in_pad - d_in), (0, 0)))

    # Fuse the two heads into one lane-dense (512, 128) weight slab.
    wh = jnp.concatenate([wt, wr], axis=1)                 # (512, 3 + n_rot)
    wh = jnp.pad(wh, ((0, 0), (0, _LANE - (3 + n_rot))))
    bh = jnp.concatenate([bt, br], axis=1)                 # (1, 3 + n_rot)
    bh = jnp.pad(bh, ((0, 0), (0, _LANE - (3 + n_rot))))

    # bf16 MXU operands (halves HBM weight traffic); biases stay f32.
    x_bf = x_p.astype(jnp.bfloat16)
    w1_bf = w1_p.astype(jnp.bfloat16)
    w2_bf = w2.astype(jnp.bfloat16)
    wh_bf = wh.astype(jnp.bfloat16)
    b1_f = b1.astype(jnp.float32)
    b2_f = b2.astype(jnp.float32)
    bh_f = bh.astype(jnp.float32)

    head = pl.pallas_call(
        pointnet_head_kernel,
        out_shape=jax.ShapeDtypeStruct((B_pad, _LANE), jnp.float32),
        grid_spec=pltpu.PrefetchScalarGridSpec(
            num_scalar_prefetch=0,
            grid=(n_b, n_k),
            in_specs=[
                pl.BlockSpec((tb, tk), lambda b, k: (b, k)),      # x (B,K-tiled)
                pl.BlockSpec((tk, n1), lambda b, k: (k, 0)),      # w1 (K-tiled, pipelined)
                pl.BlockSpec((1, n1), lambda b, k: (0, 0)),       # b1 (resident)
                pl.BlockSpec((n1, n2), lambda b, k: (0, 0)),      # w2 (resident)
                pl.BlockSpec((1, n2), lambda b, k: (0, 0)),       # b2 (resident)
                pl.BlockSpec((n2, _LANE), lambda b, k: (0, 0)),   # fused head weight
                pl.BlockSpec((1, _LANE), lambda b, k: (0, 0)),    # fused head bias
            ],
            out_specs=pl.BlockSpec((tb, _LANE), lambda b, k: (b, 0)),
            scratch_shapes=[pltpu.VMEM((tb, n1), jnp.float32)],   # h1 accumulator
        ),
        compiler_params=pltpu.CompilerParams(
            dimension_semantics=("parallel", "arbitrary"),  # batch || , K reduction
            vmem_limit_bytes=int(budget),
        ),
    )(x_bf, w1_bf, b1_f, w2_bf, b2_f, wh_bf, bh_f)

    transl = head[:B, :3] if compute_transl else None
    yaw = head[:B, 3:3 + n_rot] if compute_rotation else None
    return transl, yaw


def init_params(key, input_dim, rotation_parameters=2):
    """Deterministic synthetic parameters with the shapes from __init__.

    Stored already transposed to (in, out); biases as (1, out)."""
    d_in = input_dim * 2
    shapes = [
        (d_in, _N1), (1, _N1),        # FC1
        (_N1, _N2), (1, _N2),         # FC2
        (_N2, 3), (1, 3),             # FC_transl
        (_N2, rotation_parameters), (1, rotation_parameters),  # FC_rot
    ]
    keys = jax.random.split(key, len(shapes))
    return tuple(
        0.05 * jax.random.normal(k, s, dtype=jnp.float32)
        for k, s in zip(keys, shapes)
    )


def reference_forward(x, params):
    """Plain-JAX reference mirroring the kernel's bf16-in / f32-accumulate math."""
    w1, b1, w2, b2, wt, bt, wr, br = params
    x2d = x.reshape(x.shape[0], -1).astype(jnp.float32)
    bf = lambda a: a.astype(jnp.bfloat16).astype(jnp.float32)
    h1 = jnp.maximum(bf(x2d) @ bf(w1) + b1, 0.0)
    h2 = jnp.maximum(bf(h1) @ bf(w2) + b2, 0.0)
    return bf(h2) @ bf(wt) + bt, bf(h2) @ bf(wr) + br


if __name__ == "__main__":
    key = jax.random.PRNGKey(0)
    k_x, k_p = jax.random.split(key)

    # Small shapes: batch=8, input_dim=32 (flattened dim = 64), rot params=2.
    B, input_dim, rot_params = 8, 32, 2
    x = jax.random.normal(k_x, (B, 2, input_dim), dtype=jnp.float32)
    params = init_params(k_p, input_dim, rot_params)

    transl, yaw = pointnet_head_forward(x, params,
                                        compute_transl=True,
                                        compute_rotation=True)
    jax.block_until_ready((transl, yaw))

    ref_t, ref_y = reference_forward(x, params)
    assert transl.shape == (B, 3) and yaw.shape == (B, rot_params)
    assert jnp.allclose(transl, ref_t, atol=2e-3, rtol=2e-3)
    assert jnp.allclose(yaw, ref_y, atol=2e-3, rtol=2e-3)

    print("KERNEL_OK")
</pallas_src>

<mosaic_0001>
module attributes {stable_mosaic.version = 11 : i64} {
  func.func @pointnet_head_kernel(%arg0: i32, %arg1: i32, %arg2: memref<8x128xbf16, #tpu.memory_space<vmem>>, %arg3: memref<128x1024xbf16, #tpu.memory_space<vmem>>, %arg4: memref<1x1024xf32, #tpu.memory_space<vmem>>, %arg5: memref<1024x512xbf16, #tpu.memory_space<vmem>>, %arg6: memref<1x512xf32, #tpu.memory_space<vmem>>, %arg7: memref<512x128xbf16, #tpu.memory_space<vmem>>, %arg8: memref<1x128xf32, #tpu.memory_space<vmem>>, %arg9: memref<8x128xf32, #tpu.memory_space<vmem>>, %arg10: memref<8x1024xf32, #tpu.memory_space<vmem>>) attributes {dimension_semantics = [#tpu.dimension_semantics<parallel>, #tpu.dimension_semantics<arbitrary>], iteration_bounds = array<i64: 1, 1>, scalar_prefetch = 0 : i64, scratch_operands = 1 : i64, tpu.core_type = #tpu.core_type<tc>, window_params = [{transform_indices = @transform_0, window_bounds = array<i64: 8, 128>}, {transform_indices = @transform_1, window_bounds = array<i64: 128, 1024>}, {pipeline_mode = #tpu.pipeline_mode<synchronous>, transform_indices = @transform_2, window_bounds = array<i64: 1, 1024>}, {pipeline_mode = #tpu.pipeline_mode<synchronous>, transform_indices = @transform_3, window_bounds = array<i64: 1024, 512>}, {pipeline_mode = #tpu.pipeline_mode<synchronous>, transform_indices = @transform_4, window_bounds = array<i64: 1, 512>}, {pipeline_mode = #tpu.pipeline_mode<synchronous>, transform_indices = @transform_5, window_bounds = array<i64: 512, 128>}, {pipeline_mode = #tpu.pipeline_mode<synchronous>, transform_indices = @transform_6, window_bounds = array<i64: 1, 128>}, {transform_indices = @transform_7, window_bounds = array<i64: 8, 128>}]} {
    %c0_i32 = arith.constant 0 : i32
    %0 = arith.cmpi eq, %arg1, %c0_i32 : i32
    %1 = arith.extui %0 : i1 to i32
    %c0_i32_0 = arith.constant 0 : i32
    %2 = arith.cmpi ne, %1, %c0_i32_0 : i32
    scf.if %2 {
      %cst_10 = arith.constant 0.000000e+00 : f32
      %12 = vector.broadcast %cst_10 : f32 to vector<8x1024xf32>
      %c0_11 = arith.constant 0 : index
      %c0_12 = arith.constant 0 : index
      %13 = vector.load %arg10[%c0_11, %c0_12] : memref<8x1024xf32, #tpu.memory_space<vmem>>, vector<8x1024xf32>
      tpu.vector_store %arg10[%c0_11, %c0_12], %12 {strides = array<i32>} : memref<8x1024xf32, #tpu.memory_space<vmem>>, vector<8x1024xf32>,
    } else {
    }
    %c0 = arith.constant 0 : index
    %c0_1 = arith.constant 0 : index
    %3 = vector.load %arg10[%c0, %c0_1] : memref<8x1024xf32, #tpu.memory_space<vmem>>, vector<8x1024xf32>
    %c0_2 = arith.constant 0 : index
    %c0_3 = arith.constant 0 : index
    %4 = vector.load %arg2[%c0_2, %c0_3] : memref<8x128xbf16, #tpu.memory_space<vmem>>, vector<8x128xbf16>
    %c0_4 = arith.constant 0 : index
    %c0_5 = arith.constant 0 : index
    %5 = vector.load %arg3[%c0_4, %c0_5] : memref<128x1024xbf16, #tpu.memory_space<vmem>>, vector<128x1024xbf16>
    %cst = arith.constant dense<0.000000e+00> : vector<8x1024xf32>
    %6 = tpu.matmul %4, %5, %cst {dimension_numbers = #tpu.dot_dimension_numbers<[1], [0], [0], [1], [0, 0, 1, 1], [], []>} : vector<8x128xbf16>, vector<128x1024xbf16>, vector<8x1024xf32> -> vector<8x1024xf32>
    %7 = arith.addf %3, %6 : vector<8x1024xf32>
    %c0_6 = arith.constant 0 : index
    %c0_7 = arith.constant 0 : index
    %8 = vector.load %arg10[%c0_6, %c0_7] : memref<8x1024xf32, #tpu.memory_space<vmem>>, vector<8x1024xf32>
    tpu.vector_store %arg10[%c0_6, %c0_7], %7 {strides = array<i32>} : memref<8x1024xf32, #tpu.memory_space<vmem>>, vector<8x1024xf32>,
    %c0_i32_8 = arith.constant 0 : i32
    %9 = arith.cmpi eq, %arg1, %c0_i32_8 : i32
    %10 = arith.extui %9 : i1 to i32
    %c0_i32_9 = arith.constant 0 : i32
    %11 = arith.cmpi ne, %10, %c0_i32_9 : i32
    scf.if %11 {
      %c0_10 = arith.constant 0 : index
      %c0_11 = arith.constant 0 : index
      %12 = vector.load %arg10[%c0_10, %c0_11] : memref<8x1024xf32, #tpu.memory_space<vmem>>, vector<8x1024xf32>
      %c0_12 = arith.constant 0 : index
      %c0_13 = arith.constant 0 : index
      %13 = vector.load %arg4[%c0_12, %c0_13] : memref<1x1024xf32, #tpu.memory_space<vmem>>, vector<1x1024xf32>
      %14 = vector.broadcast %13 : vector<1x1024xf32> to vector<8x1024xf32>
      %15 = arith.addf %12, %14 : vector<8x1024xf32>
      %cst_14 = arith.constant 0.000000e+00 : f32
      %16 = vector.broadcast %cst_14 : f32 to vector<8x1024xf32>
      %17 = arith.maximumf %15, %16 : vector<8x1024xf32>
      %18 = arith.truncf %17 : vector<8x1024xf32> to vector<8x1024xbf16>
      %c0_15 = arith.constant 0 : index
      %c0_16 = arith.constant 0 : index
      %19 = vector.load %arg5[%c0_15, %c0_16] : memref<1024x512xbf16, #tpu.memory_space<vmem>>, vector<1024x512xbf16>
      %cst_17 = arith.constant dense<0.000000e+00> : vector<8x512xf32>
      %20 = tpu.matmul %18, %19, %cst_17 {dimension_numbers = #tpu.dot_dimension_numbers<[1], [0], [0], [1], [0, 0, 1, 1], [], []>} : vector<8x1024xbf16>, vector<1024x512xbf16>, vector<8x512xf32> -> vector<8x512xf32>
      %c0_18 = arith.constant 0 : index
      %c0_19 = arith.constant 0 : index
      %21 = vector.load %arg6[%c0_18, %c0_19] : memref<1x512xf32, #tpu.memory_space<vmem>>, vector<1x512xf32>
      %22 = vector.broadcast %21 : vector<1x512xf32> to vector<8x512xf32>
      %23 = arith.addf %20, %22 : vector<8x512xf32>
      %cst_20 = arith.constant 0.000000e+00 : f32
      %24 = vector.broadcast %cst_20 : f32 to vector<8x512xf32>
      %25 = arith.maximumf %23, %24 : vector<8x512xf32>
      %26 = arith.truncf %25 : vector<8x512xf32> to vector<8x512xbf16>
      %c0_21 = arith.constant 0 : index
      %c0_22 = arith.constant 0 : index
      %27 = vector.load %arg7[%c0_21, %c0_22] : memref<512x128xbf16, #tpu.memory_space<vmem>>, vector<512x128xbf16>
      %cst_23 = arith.constant dense<0.000000e+00> : vector<8x128xf32>
      %28 = tpu.matmul %26, %27, %cst_23 {dimension_numbers = #tpu.dot_dimension_numbers<[1], [0], [0], [1], [0, 0, 1, 1], [], []>} : vector<8x512xbf16>, vector<512x128xbf16>, vector<8x128xf32> -> vector<8x128xf32>
      %c0_24 = arith.constant 0 : index
      %c0_25 = arith.constant 0 : index
      %29 = vector.load %arg8[%c0_24, %c0_25] : memref<1x128xf32, #tpu.memory_space<vmem>>, vector<1x128xf32>
      %30 = vector.broadcast %29 : vector<1x128xf32> to vector<8x128xf32>
      %31 = arith.addf %28, %30 : vector<8x128xf32>
      %c0_26 = arith.constant 0 : index
      %c0_27 = arith.constant 0 : index
      %32 = vector.load %arg9[%c0_26, %c0_27] : memref<8x128xf32, #tpu.memory_space<vmem>>, vector<8x128xf32>
      tpu.vector_store %arg9[%c0_26, %c0_27], %31 {strides = array<i32>} : memref<8x128xf32, #tpu.memory_space<vmem>>, vector<8x128xf32>,
    } else {
    }
    return
  }
  func.func @transform_0(%arg0: i32, %arg1: i32) -> (i32, i32) {
    %c0_i32 = arith.constant 0 : i32
    return %arg0, %arg1 : i32, i32
  }
  func.func @transform_1(%arg0: i32, %arg1: i32) -> (i32, i32) {
    %c0_i32 = arith.constant 0 : i32
    %c0_i32_0 = arith.constant 0 : i32
    return %arg1, %c0_i32 : i32, i32
  }
  func.func @transform_2(%arg0: i32, %arg1: i32) -> (i32, i32) {
    %c0_i32 = arith.constant 0 : i32
    %c0_i32_0 = arith.constant 0 : i32
    %c0_i32_1 = arith.constant 0 : i32
    return %c0_i32, %c0_i32_0 : i32, i32
  }
  func.func @transform_3(%arg0: i32, %arg1: i32) -> (i32, i32) {
    %c0_i32 = arith.constant 0 : i32
    %c0_i32_0 = arith.constant 0 : i32
    %c0_i32_1 = arith.constant 0 : i32
    return %c0_i32, %c0_i32_0 : i32, i32
  }
  func.func @transform_4(%arg0: i32, %arg1: i32) -> (i32, i32) {
    %c0_i32 = arith.constant 0 : i32
    %c0_i32_0 = arith.constant 0 : i32
    %c0_i32_1 = arith.constant 0 : i32
    return %c0_i32, %c0_i32_0 : i32, i32
  }
  func.func @transform_5(%arg0: i32, %arg1: i32) -> (i32, i32) {
    %c0_i32 = arith.constant 0 : i32
    %c0_i32_0 = arith.constant 0 : i32
    %c0_i32_1 = arith.constant 0 : i32
    return %c0_i32, %c0_i32_0 : i32, i32
  }
  func.func @transform_6(%arg0: i32, %arg1: i32) -> (i32, i32) {
    %c0_i32 = arith.constant 0 : i32
    %c0_i32_0 = arith.constant 0 : i32
    %c0_i32_1 = arith.constant 0 : i32
    return %c0_i32, %c0_i32_0 : i32, i32
  }
  func.func @transform_7(%arg0: i32, %arg1: i32) -> (i32, i32) {
    %c0_i32 = arith.constant 0 : i32
    %c0_i32_0 = arith.constant 0 : i32
    return %arg0, %c0_i32 : i32, i32
  }
}

</mosaic_0001>

<llo_original>
// kernel: tpu_custom_call.1
$region0: #{tpu_custom_call.1}
  #allocation0 [shape = 'u32[]', space=smem, size = 0x4, offset = 0x4, fixed_abs, tag = 'smem constant byte address 0x4 - core index']
  #allocation1 [shape = 'u32[72,128]{1,0:T(1,128)}', space=vmem, size = 0x9000, scoped, tag = 'internal scratch']
  #allocation2 [shape = 'f32[8,1024]{1,0:T(8,128)}', space=vmem, size = 0x8000, scoped, tag = 'scratch operand']
  %s0 = inlined_call_operand.hbm [shape: bf16[8,128], index: 0, kind: input, shape index: {}]
  %s1 = inlined_call_operand.hbm [shape: bf16[128,1024], index: 1, kind: input, shape index: {}]
  %s2 = inlined_call_operand.hbm [shape: f32[1,1024], index: 2, kind: input, shape index: {}]
  %s3 = inlined_call_operand.hbm [shape: bf16[1024,512], index: 3, kind: input, shape index: {}]
  %s4 = inlined_call_operand.hbm [shape: f32[1,512], index: 4, kind: input, shape index: {}]
  %s5 = inlined_call_operand.hbm [shape: bf16[512,128], index: 5, kind: input, shape index: {}]
  %s6 = inlined_call_operand.vmem [shape: f32[1,128], index: 6, kind: input, shape index: {}]
  %s7 = inlined_call_operand.hbm [shape: f32[8,128], index: 7, kind: output, shape index: {}]
  %s8 = sld [smem:[#allocation0]]
  $region70: #{tpu_custom_call.1} parent=0
    _
  %s10 = ssub.s32 1, %s8
  %s11 = scalar_select 0, %s10, %s8
  $region1: #{tpu_custom_call.1} parent=0
    #allocation3 [shape = 'u8[2048]{0}', space=vmem, size = 0x800, scoped, tag = 'input window, operand 0, single buffered']
    #allocation4 [shape = 's32[1]{0}', space=sflag, size = 0x4, scoped, tag = 'scoped memory for tpu_custom_call.1']
    #allocation5 [shape = 's32[1]{0}', space=sflag, size = 0x4, scoped, tag = 'scoped memory for tpu_custom_call.1']
    #allocation6 [shape = 'u8[262144]{0}', space=vmem, size = 0x40000, scoped, tag = 'input window, operand 1, single buffered']
    #allocation7 [shape = 's32[1]{0}', space=sflag, size = 0x4, scoped, tag = 'scoped memory for tpu_custom_call.1']
    #allocation8 [shape = 'u8[4096]{0}', space=vmem, size = 0x1000, scoped, tag = 'input window, operand 2, single buffered']
    #allocation9 [shape = 'u8[1048576]{0}', space=vmem, size = 0x100000, scoped, tag = 'input window, operand 3, single buffered']
    #allocation10 [shape = 's32[1]{0}', space=sflag, size = 0x4, scoped, tag = 'scoped memory for tpu_custom_call.1']
    #allocation11 [shape = 'u8[2048]{0}', space=vmem, size = 0x800, scoped, tag = 'input window, operand 4, single buffered']
    #allocation12 [shape = 'u8[131072]{0}', space=vmem, size = 0x20000, scoped, tag = 'input window, operand 5, single buffered']
    #allocation13 [shape = 's32[1]{0}', space=sflag, size = 0x4, scoped, tag = 'scoped memory for tpu_custom_call.1']
    #allocation14 [shape = 'u8[4096]{0}', space=vmem, size = 0x1000, scoped, tag = 'output window, operand 0, single buffered']
    %12 = vsyncpa [#allocation4], 0
    %13 = vsyncpa [#allocation7], 0
    %14 = vsyncpa [#allocation10], 0
    %15 = vsyncpa [#allocation13], 0
    %16 = vsyncpa [#allocation5], 0
    // Predicated region
    $region2: #{tpu_custom_call.1} parent=1 // pred_check
      _
    $region3: #{tpu_custom_call.1} parent=1 // pred_check_branch
      %18 = sbr.rel (0) target = $region5
    $region4: #{tpu_custom_call.1} parent=1 // pred_region
      %20 = vsyncadd [#allocation4], 0
      %s22 = sshll.u32 %s0, 4
      %s23 = int_to_ptr.hbm [resolvable:$true] %s22
      %s24 = sshll.u32 [#allocation3], 4
      %s25 = int_to_ptr.vmem [resolvable:$true] %s24
      %27 = dma.hbm_to_vmem [thread:$0]  %s23, 64, %s25, [#allocation4]
    $region5: #{tpu_custom_call.1} parent=1 // pred_fallthru
      _
    // Predicated region
    $region6: #{tpu_custom_call.1} parent=1 // pred_check
      _
    $region7: #{tpu_custom_call.1} parent=1 // pred_check_branch
      %29 = sbr.rel (0) target = $region9
    $region8: #{tpu_custom_call.1} parent=1 // pred_region
      %31 = vsyncadd [#allocation7], 0
      %s32 = sshll.u32 %s1, 4
      %s33 = int_to_ptr.hbm [resolvable:$true] %s32
      %s34 = sshll.u32 [#allocation6], 4
      %s35 = int_to_ptr.vmem [resolvable:$true] %s34
      %40 = dma.hbm_to_vmem [thread:$0]  %s33, 8192, %s35, [#allocation7], 512, 512, 32
    $region9: #{tpu_custom_call.1} parent=1 // pred_fallthru
      _
    // Predicated region
    $region10: #{tpu_custom_call.1} parent=1 // pred_check
      _
    $region11: #{tpu_custom_call.1} parent=1 // pred_check_branch
      %42 = sbr.rel (0) target = $region13
    $region12: #{tpu_custom_call.1} parent=1 // pred_region
      %44 = vsyncadd [#allocation7], 0
      %s46 = sshll.u32 %s2, 4
      %s47 = int_to_ptr.hbm [resolvable:$true] %s46
      %s48 = sshll.u32 [#allocation8], 4
      %s49 = int_to_ptr.vmem [resolvable:$true] %s48
      %51 = dma.hbm_to_vmem [thread:$0]  %s47, 128, %s49, [#allocation7]
    $region13: #{tpu_custom_call.1} parent=1 // pred_fallthru
      _
    // Predicated region
    $region14: #{tpu_custom_call.1} parent=1 // pred_check
      _
    $region15: #{tpu_custom_call.1} parent=1 // pred_check_branch
      %53 = sbr.rel (0) target = $region17
    $region16: #{tpu_custom_call.1} parent=1 // pred_region
      %55 = vsyncadd [#allocation10], 0
      %s56 = sshll.u32 %s3, 4
      %s57 = int_to_ptr.hbm [resolvable:$true] %s56
      %s58 = sshll.u32 [#allocation9], 4
      %s59 = int_to_ptr.vmem [resolvable:$true] %s58
      %64 = dma.hbm_to_vmem [thread:$0]  %s57, 32768, %s59, [#allocation10], 256, 256, 16
    $region17: #{tpu_custom_call.1} parent=1 // pred_fallthru
      _
    // Predicated region
    $region18: #{tpu_custom_call.1} parent=1 // pred_check
      _
    $region19: #{tpu_custom_call.1} parent=1 // pred_check_branch
      %66 = sbr.rel (0) target = $region21
    $region20: #{tpu_custom_call.1} parent=1 // pred_region
      %68 = vsyncadd [#allocation10], 0
      %s70 = sshll.u32 %s4, 4
      %s71 = int_to_ptr.hbm [resolvable:$true] %s70
      %s72 = sshll.u32 [#allocation11], 4
      %s73 = int_to_ptr.vmem [resolvable:$true] %s72
      %75 = dma.hbm_to_vmem [thread:$0]  %s71, 64, %s73, [#allocation10]
    $region21: #{tpu_custom_call.1} parent=1 // pred_fallthru
      _
    // Predicated region
    $region22: #{tpu_custom_call.1} parent=1 // pred_check
      _
    $region23: #{tpu_custom_call.1} parent=1 // pred_check_branch
      %77 = sbr.rel (0) target = $region25
    $region24: #{tpu_custom_call.1} parent=1 // pred_region
      %79 = vsyncadd [#allocation13], 0
      %s80 = sshll.u32 %s5, 4
      %s81 = int_to_ptr.hbm [resolvable:$true] %s80
      %s82 = sshll.u32 [#allocation12], 4
      %s83 = int_to_ptr.vmem [resolvable:$true] %s82
      %88 = dma.hbm_to_vmem [thread:$0]  %s81, 4096, %s83, [#allocation13], 64, 64, 4
    $region25: #{tpu_custom_call.1} parent=1 // pred_fallthru
      _
    // Predicated region
    $region26: #{tpu_custom_call.1} parent=1 // pred_check
      _
    $region27: #{tpu_custom_call.1} parent=1 // pred_check_branch
      %90 = sbr.rel (0) target = $region29
    $region28: #{tpu_custom_call.1} parent=1 // pred_region
      _
    $region29: #{tpu_custom_call.1} parent=1 // pred_fallthru
      _
    // Predicated region
    $region30: #{tpu_custom_call.1} parent=1 // pred_check
      _
    $region31: #{tpu_custom_call.1} parent=1 // pred_check_branch
      %92 = sbr.rel (0) target = $region33
    $region32: #{tpu_custom_call.1} parent=1 // pred_region
      %94 = dma.done [#allocation4], 64
    $region33: #{tpu_custom_call.1} parent=1 // pred_fallthru
      _
    // Predicated region
    $region34: #{tpu_custom_call.1} parent=1 // pred_check
      _
    $region35: #{tpu_custom_call.1} parent=1 // pred_check_branch
      %96 = sbr.rel (0) target = $region37
    $region36: #{tpu_custom_call.1} parent=1 // pred_region
      %98 = dma.done [#allocation7], 8192
    $region37: #{tpu_custom_call.1} parent=1 // pred_fallthru
      _
    // Predicated region
    $region38: #{tpu_custom_call.1} parent=1 // pred_check
      _
    $region39: #{tpu_custom_call.1} parent=1 // pred_check_branch
      %100 = sbr.rel (0) target = $region41
    $region40: #{tpu_custom_call.1} parent=1 // pred_region
      %102 = dma.done [#allocation7], 128
    $region41: #{tpu_custom_call.1} parent=1 // pred_fallthru
      _
    // Predicated region
    $region42: #{tpu_custom_call.1} parent=1 // pred_check
      _
    $region43: #{tpu_custom_call.1} parent=1 // pred_check_branch
      %104 = sbr.rel (0) target = $region45
    $region44: #{tpu_custom_call.1} parent=1 // pred_region
      %106 = dma.done [#allocation10], 32768
    $region45: #{tpu_custom_call.1} parent=1 // pred_fallthru
      _
    // Predicated region
    $region46: #{tpu_custom_call.1} parent=1 // pred_check
      _
    $region47: #{tpu_custom_call.1} parent=1 // pred_check_branch
      %108 = sbr.rel (0) target = $region49
    $region48: #{tpu_custom_call.1} parent=1 // pred_region
      %110 = dma.done [#allocation10], 64
    $region49: #{tpu_custom_call.1} parent=1 // pred_fallthru
      _
    // Predicated region
    $region50: #{tpu_custom_call.1} parent=1 // pred_check
      _
    $region51: #{tpu_custom_call.1} parent=1 // pred_check_branch
      %112 = sbr.rel (0) target = $region53
    $region52: #{tpu_custom_call.1} parent=1 // pred_region
      %114 = dma.done [#allocation13], 4096
    $region53: #{tpu_custom_call.1} parent=1 // pred_fallthru
      _
    %p115 = scmp.eq.s32.totalorder 0, 0
    // Predicated region
    $region54: #{tpu_custom_call.1} parent=1 // pred_check
      %p116 = pneg %p115
    $region55: #{tpu_custom_call.1} parent=1 // pred_check_branch
      %118 = sbr.rel (%p116) target = $region57
    $region56: #{tpu_custom_call.1} parent=1 // pred_region
      %119 = vst [vmem:[#allocation2] sm:$0xff] 0.0
      %120 = vst [vmem:[#allocation2 + $0x8] sm:$0xff] 0.0
      %121 = vst [vmem:[#allocation2 + $0x10] sm:$0xff] 0.0
      %122 = vst [vmem:[#allocation2 + $0x18] sm:$0xff] 0.0
      %123 = vst [vmem:[#allocation2 + $0x20] sm:$0xff] 0.0
      %124 = vst [vmem:[#allocation2 + $0x28] sm:$0xff] 0.0
      %125 = vst [vmem:[#allocation2 + $0x30] sm:$0xff] 0.0
      %126 = vst [vmem:[#allocation2 + $0x38] sm:$0xff] 0.0
    $region57: #{tpu_custom_call.1} parent=1 // pred_fallthru
      _
    %v127 = vld [vmem:[#allocation2] sm:$0xff]
    %v128 = vld [vmem:[#allocation2 + $0x8] sm:$0xff]
    %v129 = vld [vmem:[#allocation2 + $0x10] sm:$0xff]
    %v130 = vld [vmem:[#allocation2 + $0x18] sm:$0xff]
    %v131 = vld [vmem:[#allocation2 + $0x20] sm:$0xff]
    %v132 = vld [vmem:[#allocation2 + $0x28] sm:$0xff]
    %v133 = vld [vmem:[#allocation2 + $0x30] sm:$0xff]
    %v134 = vld [vmem:[#allocation2 + $0x38] sm:$0xff]
    %v135 = vld [vmem:[#allocation3] sm:$0xf]
    %v136 = vld [vmem:[#allocation6] sm:$0xff]
    %v137 = vld [vmem:[#allocation6 + $0x8] sm:$0xff]
    %v138 = vld [vmem:[#allocation6 + $0x10] sm:$0xff]
    %v139 = vld [vmem:[#allocation6 + $0x18] sm:$0xff]
    %v140 = vld [vmem:[#allocation6 + $0x20] sm:$0xff]
    %v141 = vld [vmem:[#allocation6 + $0x28] sm:$0xff]
    %v142 = vld [vmem:[#allocation6 + $0x30] sm:$0xff]
    %v143 = vld [vmem:[#allocation6 + $0x38] sm:$0xff]
    %v144 = vld [vmem:[#allocation6 + $0x40] sm:$0xff]
    %v145 = vld [vmem:[#allocation6 + $0x48] sm:$0xff]
    %v146 = vld [vmem:[#allocation6 + $0x50] sm:$0xff]
    %v147 = vld [vmem:[#allocation6 + $0x58] sm:$0xff]
    %v148 = vld [vmem:[#allocation6 + $0x60] sm:$0xff]
    %v149 = vld [vmem:[#allocation6 + $0x68] sm:$0xff]
    %v150 = vld [vmem:[#allocation6 + $0x70] sm:$0xff]
    %v151 = vld [vmem:[#allocation6 + $0x78] sm:$0xff]
    %v152 = vld [vmem:[#allocation6 + $0x80] sm:$0xff]
    %v153 = vld [vmem:[#allocation6 + $0x88] sm:$0xff]
    %v154 = vld [vmem:[#allocation6 + $0x90] sm:$0xff]
    %v155 = vld [vmem:[#allocation6 + $0x98] sm:$0xff]
    %v156 = vld [vmem:[#allocation6 + $0xa0] sm:$0xff]
    %v157 = vld [vmem:[#allocation6 + $0xa8] sm:$0xff]
    %v158 = vld [vmem:[#allocation6 + $0xb0] sm:$0xff]
    %v159 = vld [vmem:[#allocation6 + $0xb8] sm:$0xff]
    %v160 = vld [vmem:[#allocation6 + $0xc0] sm:$0xff]
    %v161 = vld [vmem:[#allocation6 + $0xc8] sm:$0xff]
    %v162 = vld [vmem:[#allocation6 + $0xd0] sm:$0xff]
    %v163 = vld [vmem:[#allocation6 + $0xd8] sm:$0xff]
    %v164 = vld [vmem:[#allocation6 + $0xe0] sm:$0xff]
    %v165 = vld [vmem:[#allocation6 + $0xe8] sm:$0xff]
    %v166 = vld [vmem:[#allocation6 + $0xf0] sm:$0xff]
    %v167 = vld [vmem:[#allocation6 + $0xf8] sm:$0xff]
    %v168 = vld [vmem:[#allocation6 + $0x100] sm:$0xff]
    %v169 = vld [vmem:[#allocation6 + $0x108] sm:$0xff]
    %v170 = vld [vmem:[#allocation6 + $0x110] sm:$0xff]
    %v171 = vld [vmem:[#allocation6 + $0x118] sm:$0xff]
    %v172 = vld [vmem:[#allocation6 + $0x120] sm:$0xff]
    %v173 = vld [vmem:[#allocation6 + $0x128] sm:$0xff]
    %v174 = vld [vmem:[#allocation6 + $0x130] sm:$0xff]
    %v175 = vld [vmem:[#allocation6 + $0x138] sm:$0xff]
    %v176 = vld [vmem:[#allocation6 + $0x140] sm:$0xff]
    %v177 = vld [vmem:[#allocation6 + $0x148] sm:$0xff]
    %v178 = vld [vmem:[#allocation6 + $0x150] sm:$0xff]
    %v179 = vld [vmem:[#allocation6 + $0x158] sm:$0xff]
    %v180 = vld [vmem:[#allocation6 + $0x160] sm:$0xff]
    %v181 = vld [vmem:[#allocation6 + $0x168] sm:$0xff]
    %v182 = vld [vmem:[#allocation6 + $0x170] sm:$0xff]
    %v183 = vld [vmem:[#allocation6 + $0x178] sm:$0xff]
    %v184 = vld [vmem:[#allocation6 + $0x180] sm:$0xff]
    %v185 = vld [vmem:[#allocation6 + $0x188] sm:$0xff]
    %v186 = vld [vmem:[#allocation6 + $0x190] sm:$0xff]
    %v187 = vld [vmem:[#allocation6 + $0x198] sm:$0xff]
    %v188 = vld [vmem:[#allocation6 + $0x1a0] sm:$0xff]
    %v189 = vld [vmem:[#allocation6 + $0x1a8] sm:$0xff]
    %v190 = vld [vmem:[#allocation6 + $0x1b0] sm:$0xff]
    %v191 = vld [vmem:[#allocation6 + $0x1b8] sm:$0xff]
    %v192 = vld [vmem:[#allocation6 + $0x1c0] sm:$0xff]
    %v193 = vld [vmem:[#allocation6 + $0x1c8] sm:$0xff]
    %v194 = vld [vmem:[#allocation6 + $0x1d0] sm:$0xff]
    %v195 = vld [vmem:[#allocation6 + $0x1d8] sm:$0xff]
    %v196 = vld [vmem:[#allocation6 + $0x1e0] sm:$0xff]
    %v197 = vld [vmem:[#allocation6 + $0x1e8] sm:$0xff]
    %v198 = vld [vmem:[#allocation6 + $0x1f0] sm:$0xff]
    %v199 = vld [vmem:[#allocation6 + $0x1f8] sm:$0xff]
    %v264 = vunpack.c.l.b16 %v136
    %v265 = vunpack.c.h.b16 %v136
    %v266 = vunpack.c.l.b16 %v137
    %v267 = vunpack.c.h.b16 %v137
    %v268 = vunpack.c.l.b16 %v138
    %v269 = vunpack.c.h.b16 %v138
    %v270 = vunpack.c.l.b16 %v139
    %v271 = vunpack.c.h.b16 %v139
    %v272 = vunpack.c.l.b16 %v140
    %v273 = vunpack.c.h.b16 %v140
    %v274 = vunpack.c.l.b16 %v141
    %v275 = vunpack.c.h.b16 %v141
    %v276 = vunpack.c.l.b16 %v142
    %v277 = vunpack.c.h.b16 %v142
    %v278 = vunpack.c.l.b16 %v143
    %v279 = vunpack.c.h.b16 %v143
    %v280 = vunpack.c.l.b16 %v144
    %v281 = vunpack.c.h.b16 %v144
    %v282 = vunpack.c.l.b16 %v145
    %v283 = vunpack.c.h.b16 %v145
    %v284 = vunpack.c.l.b16 %v146
    %v285 = vunpack.c.h.b16 %v146
    %v286 = vunpack.c.l.b16 %v147
    %v287 = vunpack.c.h.b16 %v147
    %v288 = vunpack.c.l.b16 %v148
    %v289 = vunpack.c.h.b16 %v148
    %v290 = vunpack.c.l.b16 %v149
    %v291 = vunpack.c.h.b16 %v149
    %v292 = vunpack.c.l.b16 %v150
    %v293 = vunpack.c.h.b16 %v150
    %v294 = vunpack.c.l.b16 %v151
    %v295 = vunpack.c.h.b16 %v151
    %v296 = vunpack.c.l.b16 %v152
    %v297 = vunpack.c.h.b16 %v152
    %v298 = vunpack.c.l.b16 %v153
    %v299 = vunpack.c.h.b16 %v153
    %v300 = vunpack.c.l.b16 %v154
    %v301 = vunpack.c.h.b16 %v154
    %v302 = vunpack.c.l.b16 %v155
    %v303 = vunpack.c.h.b16 %v155
    %v304 = vunpack.c.l.b16 %v156
    %v305 = vunpack.c.h.b16 %v156
    %v306 = vunpack.c.l.b16 %v157
    %v307 = vunpack.c.h.b16 %v157
    %v308 = vunpack.c.l.b16 %v158
    %v309 = vunpack.c.h.b16 %v158
    %v310 = vunpack.c.l.b16 %v159
    %v311 = vunpack.c.h.b16 %v159
    %v312 = vunpack.c.l.b16 %v160
    %v313 = vunpack.c.h.b16 %v160
    %v314 = vunpack.c.l.b16 %v161
    %v315 = vunpack.c.h.b16 %v161
    %v316 = vunpack.c.l.b16 %v162
    %v317 = vunpack.c.h.b16 %v162
    %v318 = vunpack.c.l.b16 %v163
    %v319 = vunpack.c.h.b16 %v163
    %v320 = vunpack.c.l.b16 %v164
    %v321 = vunpack.c.h.b16 %v164
    %v322 = vunpack.c.l.b16 %v165
    %v323 = vunpack.c.h.b16 %v165
    %v324 = vunpack.c.l.b16 %v166
    %v325 = vunpack.c.h.b16 %v166
    %v326 = vunpack.c.l.b16 %v167
    %v327 = vunpack.c.h.b16 %v167
    %v328 = vunpack.c.l.b16 %v168
    %v329 = vunpack.c.h.b16 %v168
    %v330 = vunpack.c.l.b16 %v169
    %v331 = vunpack.c.h.b16 %v169
    %v332 = vunpack.c.l.b16 %v170
    %v333 = vunpack.c.h.b16 %v170
    %v334 = vunpack.c.l.b16 %v171
    %v335 = vunpack.c.h.b16 %v171
    %v336 = vunpack.c.l.b16 %v172
    %v337 = vunpack.c.h.b16 %v172
    %v338 = vunpack.c.l.b16 %v173
    %v339 = vunpack.c.h.b16 %v173
    %v340 = vunpack.c.l.b16 %v174
    %v341 = vunpack.c.h.b16 %v174
    %v342 = vunpack.c.l.b16 %v175
    %v343 = vunpack.c.h.b16 %v175
    %v344 = vunpack.c.l.b16 %v176
    %v345 = vunpack.c.h.b16 %v176
    %v346 = vunpack.c.l.b16 %v177
    %v347 = vunpack.c.h.b16 %v177
    %v348 = vunpack.c.l.b16 %v178
    %v349 = vunpack.c.h.b16 %v178
    %v350 = vunpack.c.l.b16 %v179
    %v351 = vunpack.c.h.b16 %v179
    %v352 = vunpack.c.l.b16 %v180
    %v353 = vunpack.c.h.b16 %v180
    %v354 = vunpack.c.l.b16 %v181
    %v355 = vunpack.c.h.b16 %v181
    %v356 = vunpack.c.l.b16 %v182
    %v357 = vunpack.c.h.b16 %v182
    %v358 = vunpack.c.l.b16 %v183
    %v359 = vunpack.c.h.b16 %v183
    %v360 = vunpack.c.l.b16 %v184
    %v361 = vunpack.c.h.b16 %v184
    %v362 = vunpack.c.l.b16 %v185
    %v363 = vunpack.c.h.b16 %v185
    %v364 = vunpack.c.l.b16 %v186
    %v365 = vunpack.c.h.b16 %v186
    %v366 = vunpack.c.l.b16 %v187
    %v367 = vunpack.c.h.b16 %v187
    %v368 = vunpack.c.l.b16 %v188
    %v369 = vunpack.c.h.b16 %v188
    %v370 = vunpack.c.l.b16 %v189
    %v371 = vunpack.c.h.b16 %v189
    %v372 = vunpack.c.l.b16 %v190
    %v373 = vunpack.c.h.b16 %v190
    %v374 = vunpack.c.l.b16 %v191
    %v375 = vunpack.c.h.b16 %v191
    %v376 = vunpack.c.l.b16 %v192
    %v377 = vunpack.c.h.b16 %v192
    %v378 = vunpack.c.l.b16 %v193
    %v379 = vunpack.c.h.b16 %v193
    %v380 = vunpack.c.l.b16 %v194
    %v381 = vunpack.c.h.b16 %v194
    %v382 = vunpack.c.l.b16 %v195
    %v383 = vunpack.c.h.b16 %v195
    %v384 = vunpack.c.l.b16 %v196
    %v385 = vunpack.c.h.b16 %v196
    %v386 = vunpack.c.l.b16 %v197
    %v387 = vunpack.c.h.b16 %v197
    %v388 = vunpack.c.l.b16 %v198
    %v389 = vunpack.c.h.b16 %v198
    %v390 = vunpack.c.l.b16 %v199
    %v391 = vunpack.c.h.b16 %v199
    %v392 = vpack.c.b16 %v272, %v264
    %v393 = vpack.c.b16 %v273, %v265
    %v394 = vpack.c.b16 %v274, %v266
    %v395 = vpack.c.b16 %v275, %v267
    %v396 = vpack.c.b16 %v276, %v268
    %v397 = vpack.c.b16 %v277, %v269
    %v398 = vpack.c.b16 %v278, %v270
    %v399 = vpack.c.b16 %v279, %v271
    %v400 = vpack.c.b16 %v288, %v280
    %v401 = vpack.c.b16 %v289, %v281
    %v402 = vpack.c.b16 %v290, %v282
    %v403 = vpack.c.b16 %v291, %v283
    %v404 = vpack.c.b16 %v292, %v284
    %v405 = vpack.c.b16 %v293, %v285
    %v406 = vpack.c.b16 %v294, %v286
    %v407 = vpack.c.b16 %v295, %v287
    %v408 = vpack.c.b16 %v304, %v296
    %v409 = vpack.c.b16 %v305, %v297
    %v410 = vpack.c.b16 %v306, %v298
    %v411 = vpack.c.b16 %v307, %v299
    %v412 = vpack.c.b16 %v308, %v300
    %v413 = vpack.c.b16 %v309, %v301
    %v414 = vpack.c.b16 %v310, %v302
    %v415 = vpack.c.b16 %v311, %v303
    %v416 = vpack.c.b16 %v320, %v312
    %v417 = vpack.c.b16 %v321, %v313
    %v418 = vpack.c.b16 %v322, %v314
    %v419 = vpack.c.b16 %v323, %v315
    %v420 = vpack.c.b16 %v324, %v316
    %v421 = vpack.c.b16 %v325, %v317
    %v422 = vpack.c.b16 %v326, %v318
    %v423 = vpack.c.b16 %v327, %v319
    %v424 = vpack.c.b16 %v336, %v328
    %v425 = vpack.c.b16 %v337, %v329
    %v426 = vpack.c.b16 %v338, %v330
    %v427 = vpack.c.b16 %v339, %v331
    %v428 = vpack.c.b16 %v340, %v332
    %v429 = vpack.c.b16 %v341, %v333
    %v430 = vpack.c.b16 %v342, %v334
    %v431 = vpack.c.b16 %v343, %v335
    %v432 = vpack.c.b16 %v352, %v344
    %v433 = vpack.c.b16 %v353, %v345
    %v434 = vpack.c.b16 %v354, %v346
    %v435 = vpack.c.b16 %v355, %v347
    %v436 = vpack.c.b16 %v356, %v348
    %v437 = vpack.c.b16 %v357, %v349
    %v438 = vpack.c.b16 %v358, %v350
    %v439 = vpack.c.b16 %v359, %v351
    %v440 = vpack.c.b16 %v368, %v360
    %v441 = vpack.c.b16 %v369, %v361
    %v442 = vpack.c.b16 %v370, %v362
    %v443 = vpack.c.b16 %v371, %v363
    %v444 = vpack.c.b16 %v372, %v364
    %v445 = vpack.c.b16 %v373, %v365
    %v446 = vpack.c.b16 %v374, %v366
    %v447 = vpack.c.b16 %v375, %v367
    %v448 = vpack.c.b16 %v384, %v376
    %v449 = vpack.c.b16 %v385, %v377
    %v450 = vpack.c.b16 %v386, %v378
    %v451 = vpack.c.b16 %v387, %v379
    %v452 = vpack.c.b16 %v388, %v380
    %v453 = vpack.c.b16 %v389, %v381
    %v454 = vpack.c.b16 %v390, %v382
    %v455 = vpack.c.b16 %v391, %v383
    %520 = vmatpush.bf16.msra.mxu0 %v448
    %521 = vmatpush.bf16.msra.mxu0 %v440
    %522 = vmatpush.bf16.msra.mxu0 %v432
    %523 = vmatpush.bf16.msra.mxu0 %v424
    %524 = vmatpush.bf16.msra.mxu0 %v416
    %525 = vmatpush.bf16.msra.mxu0 %v408
    %526 = vmatpush.bf16.msra.mxu0 %v400
    %527 = vmatpush.bf16.msra.mxu0 %v392
    %528 = vmatmul.bf16.gmra.mxu0 %v135
    %v529 = vpop.f32.mrf.mxu0
    %v530 = vadd.f32 0.0, %v529
    %v531 = vpop.f32.mrf.mxu0
    %532 = vdwg.mxu0
    %533 = vmatpush.bf16.msra.mxu0 %v449
    %534 = vmatpush.bf16.msra.mxu0 %v441
    %535 = vmatpush.bf16.msra.mxu0 %v433
    %536 = vmatpush.bf16.msra.mxu0 %v425
    %537 = vmatpush.bf16.msra.mxu0 %v417
    %538 = vmatpush.bf16.msra.mxu0 %v409
    %539 = vmatpush.bf16.msra.mxu0 %v401
    %540 = vmatpush.bf16.msra.mxu0 %v393
    %541 = vmatmul.bf16.gmra.mxu0 %v135
    %v542 = vpop.f32.mrf.mxu0
    %v543 = vadd.f32 0.0, %v542
    %v544 = vpop.f32.mrf.mxu0
    %545 = vdwg.mxu0
    %546 = vmatpush.bf16.msra.mxu0 %v450
    %547 = vmatpush.bf16.msra.mxu0 %v442
    %548 = vmatpush.bf16.msra.mxu0 %v434
    %549 = vmatpush.bf16.msra.mxu0 %v426
    %550 = vmatpush.bf16.msra.mxu0 %v418
    %551 = vmatpush.bf16.msra.mxu0 %v410
    %552 = vmatpush.bf16.msra.mxu0 %v402
    %553 = vmatpush.bf16.msra.mxu0 %v394
    %554 = vmatmul.bf16.gmra.mxu0 %v135
    %v555 = vpop.f32.mrf.mxu0
    %v556 = vadd.f32 0.0, %v555
    %v557 = vpop.f32.mrf.mxu0
    %558 = vdwg.mxu0
    %559 = vmatpush.bf16.msra.mxu0 %v451
    %560 = vmatpush.bf16.msra.mxu0 %v443
    %561 = vmatpush.bf16.msra.mxu0 %v435
    %562 = vmatpush.bf16.msra.mxu0 %v427
    %563 = vmatpush.bf16.msra.mxu0 %v419
    %564 = vmatpush.bf16.msra.mxu0 %v411
    %565 = vmatpush.bf16.msra.mxu0 %v403
    %566 = vmatpush.bf16.msra.mxu0 %v395
    %567 = vmatmul.bf16.gmra.mxu0 %v135
    %v568 = vpop.f32.mrf.mxu0
    %v569 = vadd.f32 0.0, %v568
    %v570 = vpop.f32.mrf.mxu0
    %571 = vdwg.mxu0
    %572 = vmatpush.bf16.msra.mxu0 %v452
    %573 = vmatpush.bf16.msra.mxu0 %v444
    %574 = vmatpush.bf16.msra.mxu0 %v436
    %575 = vmatpush.bf16.msra.mxu0 %v428
    %576 = vmatpush.bf16.msra.mxu0 %v420
    %577 = vmatpush.bf16.msra.mxu0 %v412
    %578 = vmatpush.bf16.msra.mxu0 %v404
    %579 = vmatpush.bf16.msra.mxu0 %v396
    %580 = vmatmul.bf16.gmra.mxu0 %v135
    %v581 = vpop.f32.mrf.mxu0
    %v582 = vadd.f32 0.0, %v581
    %v583 = vpop.f32.mrf.mxu0
    %584 = vdwg.mxu0
    %585 = vmatpush.bf16.msra.mxu0 %v453
    %586 = vmatpush.bf16.msra.mxu0 %v445
    %587 = vmatpush.bf16.msra.mxu0 %v437
    %588 = vmatpush.bf16.msra.mxu0 %v429
    %589 = vmatpush.bf16.msra.mxu0 %v421
    %590 = vmatpush.bf16.msra.mxu0 %v413
    %591 = vmatpush.bf16.msra.mxu0 %v405
    %592 = vmatpush.bf16.msra.mxu0 %v397
    %593 = vmatmul.bf16.gmra.mxu0 %v135
    %v594 = vpop.f32.mrf.mxu0
    %v595 = vadd.f32 0.0, %v594
    %v596 = vpop.f32.mrf.mxu0
    %597 = vdwg.mxu0
    %598 = vmatpush.bf16.msra.mxu0 %v454
    %599 = vmatpush.bf16.msra.mxu0 %v446
    %600 = vmatpush.bf16.msra.mxu0 %v438
    %601 = vmatpush.bf16.msra.mxu0 %v430
    %602 = vmatpush.bf16.msra.mxu0 %v422
    %603 = vmatpush.bf16.msra.mxu0 %v414
    %604 = vmatpush.bf16.msra.mxu0 %v406
    %605 = vmatpush.bf16.msra.mxu0 %v398
    %606 = vmatmul.bf16.gmra.mxu0 %v135
    %v607 = vpop.f32.mrf.mxu0
    %v608 = vadd.f32 0.0, %v607
    %v609 = vpop.f32.mrf.mxu0
    %610 = vdwg.mxu0
    %611 = vmatpush.bf16.msra.mxu0 %v455
    %612 = vmatpush.bf16.msra.mxu0 %v447
    %613 = vmatpush.bf16.msra.mxu0 %v439
    %614 = vmatpush.bf16.msra.mxu0 %v431
    %615 = vmatpush.bf16.msra.mxu0 %v423
    %616 = vmatpush.bf16.msra.mxu0 %v415
    %617 = vmatpush.bf16.msra.mxu0 %v407
    %618 = vmatpush.bf16.msra.mxu0 %v399
    %619 = vmatmul.bf16.gmra.mxu0 %v135
    %v620 = vpop.f32.mrf.mxu0
    %v621 = vadd.f32 0.0, %v620
    %v622 = vpop.f32.mrf.mxu0
    %623 = vdwg.mxu0
    %v624 = vadd.f32 %v127, %v530
    %v625 = vadd.f32 %v128, %v543
    %v626 = vadd.f32 %v129, %v556
    %v627 = vadd.f32 %v130, %v569
    %v628 = vadd.f32 %v131, %v582
    %v629 = vadd.f32 %v132, %v595
    %v630 = vadd.f32 %v133, %v608
    %v631 = vadd.f32 %v134, %v621
    %632 = vst [vmem:[#allocation2] sm:$0xff] %v624
    %633 = vst [vmem:[#allocation2 + $0x8] sm:$0xff] %v625
    %634 = vst [vmem:[#allocation2 + $0x10] sm:$0xff] %v626
    %635 = vst [vmem:[#allocation2 + $0x18] sm:$0xff] %v627
    %636 = vst [vmem:[#allocation2 + $0x20] sm:$0xff] %v628
    %637 = vst [vmem:[#allocation2 + $0x28] sm:$0xff] %v629
    %638 = vst [vmem:[#allocation2 + $0x30] sm:$0xff] %v630
    %639 = vst [vmem:[#allocation2 + $0x38] sm:$0xff] %v631
    // Predicated region
    $region58: #{tpu_custom_call.1} parent=1 // pred_check
      %p640 = pneg %p115
    $region59: #{tpu_custom_call.1} parent=1 // pred_check_branch
      %642 = sbr.rel (%p640) target = $region61
    $region60: #{tpu_custom_call.1} parent=1 // pred_region
      %v643 = vld [vmem:[#allocation2] sm:$0xff]
      %v644 = vld [vmem:[#allocation2 + $0x8] sm:$0xff]
      %v645 = vld [vmem:[#allocation2 + $0x10] sm:$0xff]
      %v646 = vld [vmem:[#allocation2 + $0x18] sm:$0xff]
      %v647 = vld [vmem:[#allocation2 + $0x20] sm:$0xff]
      %v648 = vld [vmem:[#allocation2 + $0x28] sm:$0xff]
      %v649 = vld [vmem:[#allocation2 + $0x30] sm:$0xff]
      %v650 = vld [vmem:[#allocation2 + $0x38] sm:$0xff]
      %v651 = vld [vmem:[#allocation8] sm:$0xff]
      %v653 = vperm.slane %v651, 0
      %v654 = vperm.slane %v651, 1
      %v655 = vperm.slane %v651, 2
      %v656 = vperm.slane %v651, 3
      %v657 = vperm.slane %v651, 4
      %v658 = vperm.slane %v651, 5
      %v659 = vperm.slane %v651, 6
      %v660 = vperm.slane %v651, 7
      %v669 = vadd.f32 %v643, %v653
      %v670 = vadd.f32 %v644, %v654
      %v671 = vadd.f32 %v645, %v655
      %v672 = vadd.f32 %v646, %v656
      %v673 = vadd.f32 %v647, %v657
      %v674 = vadd.f32 %v648, %v658
      %v675 = vadd.f32 %v649, %v659
      %v676 = vadd.f32 %v650, %v660
      %v677 = vmax.f32 %v669, 0.0
      %v678 = vmax.f32 %v670, 0.0
      %v679 = vmax.f32 %v671, 0.0
      %v680 = vmax.f32 %v672, 0.0
      %v681 = vmax.f32 %v673, 0.0
      %v682 = vmax.f32 %v674, 0.0
      %v683 = vmax.f32 %v675, 0.0
      %v684 = vmax.f32 %v676, 0.0
      %v685 = vpack.c.bf16 %v677, %v677
      %v686 = vpack.c.bf16 %v678, %v678
      %v687 = vpack.c.bf16 %v679, %v679
      %v688 = vpack.c.bf16 %v680, %v680
      %v689 = vpack.c.bf16 %v681, %v681
      %v690 = vpack.c.bf16 %v682, %v682
      %v691 = vpack.c.bf16 %v683, %v683
      %v692 = vpack.c.bf16 %v684, %v684
      %v693 = vld [vmem:[#allocation9] sm:$0xff]
      %v694 = vld [vmem:[#allocation9 + $0x8] sm:$0xff]
      %v695 = vld [vmem:[#allocation9 + $0x10] sm:$0xff]
      %v696 = vld [vmem:[#allocation9 + $0x18] sm:$0xff]
      %v697 = vld [vmem:[#allocation9 + $0x20] sm:$0xff]
      %v698 = vld [vmem:[#allocation9 + $0x28] sm:$0xff]
      %v699 = vld [vmem:[#allocation9 + $0x30] sm:$0xff]
      %v700 = vld [vmem:[#allocation9 + $0x38] sm:$0xff]
      %v701 = vld [vmem:[#allocation9 + $0x40] sm:$0xff]
      %v702 = vld [vmem:[#allocation9 + $0x48] sm:$0xff]
      %v703 = vld [vmem:[#allocation9 + $0x50] sm:$0xff]
      %v704 = vld [vmem:[#allocation9 + $0x58] sm:$0xff]
      %v705 = vld [vmem:[#allocation9 + $0x60] sm:$0xff]
      %v706 = vld [vmem:[#allocation9 + $0x68] sm:$0xff]
      %v707 = vld [vmem:[#allocation9 + $0x70] sm:$0xff]
      %v708 = vld [vmem:[#allocation9 + $0x78] sm:$0xff]
      %v709 = vld [vmem:[#allocation9 + $0x80] sm:$0xff]
      %v710 = vld [vmem:[#allocation9 + $0x88] sm:$0xff]
      %v711 = vld [vmem:[#allocation9 + $0x90] sm:$0xff]
      %v712 = vld [vmem:[#allocation9 + $0x98] sm:$0xff]
      %v713 = vld [vmem:[#allocation9 + $0xa0] sm:$0xff]
      %v714 = vld [vmem:[#allocation9 + $0xa8] sm:$0xff]
      %v715 = vld [vmem:[#allocation9 + $0xb0] sm:$0xff]
      %v716 = vld [vmem:[#allocation9 + $0xb8] sm:$0xff]
      %v717 = vld [vmem:[#allocation9 + $0xc0] sm:$0xff]
      %v718 = vld [vmem:[#allocation9 + $0xc8] sm:$0xff]
      %v719 = vld [vmem:[#allocation9 + $0xd0] sm:$0xff]
      %v720 = vld [vmem:[#allocation9 + $0xd8] sm:$0xff]
      %v721 = vld [vmem:[#allocation9 + $0xe0] sm:$0xff]
      %v722 = vld [vmem:[#allocation9 + $0xe8] sm:$0xff]
      %v723 = vld [vmem:[#allocation9 + $0xf0] sm:$0xff]
      %v724 = vld [vmem:[#allocation9 + $0xf8] sm:$0xff]
      %v725 = vld [vmem:[#allocation9 + $0x100] sm:$0xff]
      %v726 = vld [vmem:[#allocation9 + $0x108] sm:$0xff]
      %v727 = vld [vmem:[#allocation9 + $0x110] sm:$0xff]
      %v728 = vld [vmem:[#allocation9 + $0x118] sm:$0xff]
      %v729 = vld [vmem:[#allocation9 + $0x120] sm:$0xff]
      %v730 = vld [vmem:[#allocation9 + $0x128] sm:$0xff]
      %v731 = vld [vmem:[#allocation9 + $0x130] sm:$0xff]
      %v732 = vld [vmem:[#allocation9 + $0x138] sm:$0xff]
      %v733 = vld [vmem:[#allocation9 + $0x140] sm:$0xff]
      %v734 = vld [vmem:[#allocation9 + $0x148] sm:$0xff]
      %v735 = vld [vmem:[#allocation9 + $0x150] sm:$0xff]
      %v736 = vld [vmem:[#allocation9 + $0x158] sm:$0xff]
      %v737 = vld [vmem:[#allocation9 + $0x160] sm:$0xff]
      %v738 = vld [vmem:[#allocation9 + $0x168] sm:$0xff]
      %v739 = vld [vmem:[#allocation9 + $0x170] sm:$0xff]
      %v740 = vld [vmem:[#allocation9 + $0x178] sm:$0xff]
      %v741 = vld [vmem:[#allocation9 + $0x180] sm:$0xff]
      %v742 = vld [vmem:[#allocation9 + $0x188] sm:$0xff]
      %v743 = vld [vmem:[#allocation9 + $0x190] sm:$0xff]
      %v744 = vld [vmem:[#allocation9 + $0x198] sm:$0xff]
      %v745 = vld [vmem:[#allocation9 + $0x1a0] sm:$0xff]
      %v746 = vld [vmem:[#allocation9 + $0x1a8] sm:$0xff]
      %v747 = vld [vmem:[#allocation9 + $0x1b0] sm:$0xff]
      %v748 = vld [vmem:[#allocation9 + $0x1b8] sm:$0xff]
      %v749 = vld [vmem:[#allocation9 + $0x1c0] sm:$0xff]
      %v750 = vld [vmem:[#allocation9 + $0x1c8] sm:$0xff]
      %v751 = vld [vmem:[#allocation9 + $0x1d0] sm:$0xff]
      %v752 = vld [vmem:[#allocation9 + $0x1d8] sm:$0xff]
      %v753 = vld [vmem:[#allocation9 + $0x1e0] sm:$0xff]
      %v754 = vld [vmem:[#allocation9 + $0x1e8] sm:$0xff]
      %v755 = vld [vmem:[#allocation9 + $0x1f0] sm:$0xff]
      %v756 = vld [vmem:[#allocation9 + $0x1f8] sm:$0xff]
      %v757 = vld [vmem:[#allocation9 + $0x200] sm:$0xff]
      %v758 = vld [vmem:[#allocation9 + $0x208] sm:$0xff]
      %v759 = vld [vmem:[#allocation9 + $0x210] sm:$0xff]
      %v760 = vld [vmem:[#allocation9 + $0x218] sm:$0xff]
      %v761 = vld [vmem:[#allocation9 + $0x220] sm:$0xff]
      %v762 = vld [vmem:[#allocation9 + $0x228] sm:$0xff]
      %v763 = vld [vmem:[#allocation9 + $0x230] sm:$0xff]
      %v764 = vld [vmem:[#allocation9 + $0x238] sm:$0xff]
      %v765 = vld [vmem:[#allocation9 + $0x240] sm:$0xff]
      %v766 = vld [vmem:[#allocation9 + $0x248] sm:$0xff]
      %v767 = vld [vmem:[#allocation9 + $0x250] sm:$0xff]
      %v768 = vld [vmem:[#allocation9 + $0x258] sm:$0xff]
      %v769 = vld [vmem:[#allocation9 + $0x260] sm:$0xff]
      %v770 = vld [vmem:[#allocation9 + $0x268] sm:$0xff]
      %v771 = vld [vmem:[#allocation9 + $0x270] sm:$0xff]
      %v772 = vld [vmem:[#allocation9 + $0x278] sm:$0xff]
      %v773 = vld [vmem:[#allocation9 + $0x280] sm:$0xff]
      %v774 = vld [vmem:[#allocation9 + $0x288] sm:$0xff]
      %v775 = vld [vmem:[#allocation9 + $0x290] sm:$0xff]
      %v776 = vld [vmem:[#allocation9 + $0x298] sm:$0xff]
      %v777 = vld [vmem:[#allocation9 + $0x2a0] sm:$0xff]
      %v778 = vld [vmem:[#allocation9 + $0x2a8] sm:$0xff]
      %v779 = vld [vmem:[#allocation9 + $0x2b0] sm:$0xff]
      %v780 = vld [vmem:[#allocation9 + $0x2b8] sm:$0xff]
      %v781 = vld [vmem:[#allocation9 + $0x2c0] sm:$0xff]
      %v782 = vld [vmem:[#allocation9 + $0x2c8] sm:$0xff]
      %v783 = vld [vmem:[#allocation9 + $0x2d0] sm:$0xff]
      %v784 = vld [vmem:[#allocation9 + $0x2d8] sm:$0xff]
      %v785 = vld [vmem:[#allocation9 + $0x2e0] sm:$0xff]
      %v786 = vld [vmem:[#allocation9 + $0x2e8] sm:$0xff]
      %v787 = vld [vmem:[#allocation9 + $0x2f0] sm:$0xff]
      %v788 = vld [vmem:[#allocation9 + $0x2f8] sm:$0xff]
      %v789 = vld [vmem:[#allocation9 + $0x300] sm:$0xff]
      %v790 = vld [vmem:[#allocation9 + $0x308] sm:$0xff]
      %v791 = vld [vmem:[#allocation9 + $0x310] sm:$0xff]
      %v792 = vld [vmem:[#allocation9 + $0x318] sm:$0xff]
      %v793 = vld [vmem:[#allocation9 + $0x320] sm:$0xff]
      %v794 = vld [vmem:[#allocation9 + $0x328] sm:$0xff]
      %v795 = vld [vmem:[#allocation9 + $0x330] sm:$0xff]
      %v796 = vld [vmem:[#allocation9 + $0x338] sm:$0xff]
      %v797 = vld [vmem:[#allocation9 + $0x340] sm:$0xff]
      %v798 = vld [vmem:[#allocation9 + $0x348] sm:$0xff]
      %v799 = vld [vmem:[#allocation9 + $0x350] sm:$0xff]
      %v800 = vld [vmem:[#allocation9 + $0x358] sm:$0xff]
      %v801 = vld [vmem:[#allocation9 + $0x360] sm:$0xff]
      %v802 = vld [vmem:[#allocation9 + $0x368] sm:$0xff]
      %v803 = vld [vmem:[#allocation9 + $0x370] sm:$0xff]
      %v804 = vld [vmem:[#allocation9 + $0x378] sm:$0xff]
      %v805 = vld [vmem:[#allocation9 + $0x380] sm:$0xff]
      %v806 = vld [vmem:[#allocation9 + $0x388] sm:$0xff]
      %v807 = vld [vmem:[#allocation9 + $0x390] sm:$0xff]
      %v808 = vld [vmem:[#allocation9 + $0x398] sm:$0xff]
      %v809 = vld [vmem:[#allocation9 + $0x3a0] sm:$0xff]
      %v810 = vld [vmem:[#allocation9 + $0x3a8] sm:$0xff]
      %v811 = vld [vmem:[#allocation9 + $0x3b0] sm:$0xff]
      %v812 = vld [vmem:[#allocation9 + $0x3b8] sm:$0xff]
      %v813 = vld [vmem:[#allocation9 + $0x3c0] sm:$0xff]
      %v814 = vld [vmem:[#allocation9 + $0x3c8] sm:$0xff]
      %v815 = vld [vmem:[#allocation9 + $0x3d0] sm:$0xff]
      %v816 = vld [vmem:[#allocation9 + $0x3d8] sm:$0xff]
      %v817 = vld [vmem:[#allocation9 + $0x3e0] sm:$0xff]
      %v818 = vld [vmem:[#allocation9 + $0x3e8] sm:$0xff]
      %v819 = vld [vmem:[#allocation9 + $0x3f0] sm:$0xff]
      %v820 = vld [vmem:[#allocation9 + $0x3f8] sm:$0xff]
      %v821 = vld [vmem:[#allocation9 + $0x400] sm:$0xff]
      %v822 = vld [vmem:[#allocation9 + $0x408] sm:$0xff]
      %v823 = vld [vmem:[#allocation9 + $0x410] sm:$0xff]
      %v824 = vld [vmem:[#allocation9 + $0x418] sm:$0xff]
      %v825 = vld [vmem:[#allocation9 + $0x420] sm:$0xff]
      %v826 = vld [vmem:[#allocation9 + $0x428] sm:$0xff]
      %v827 = vld [vmem:[#allocation9 + $0x430] sm:$0xff]
      %v828 = vld [vmem:[#allocation9 + $0x438] sm:$0xff]
      %v829 = vld [vmem:[#allocation9 + $0x440] sm:$0xff]
      %v830 = vld [vmem:[#allocation9 + $0x448] sm:$0xff]
      %v831 = vld [vmem:[#allocation9 + $0x450] sm:$0xff]
      %v832 = vld [vmem:[#allocation9 + $0x458] sm:$0xff]
      %v833 = vld [vmem:[#allocation9 + $0x460] sm:$0xff]
      %v834 = vld [vmem:[#allocation9 + $0x468] sm:$0xff]
      %v835 = vld [vmem:[#allocation9 + $0x470] sm:$0xff]
      %v836 = vld [vmem:[#allocation9 + $0x478] sm:$0xff]
      %v837 = vld [vmem:[#allocation9 + $0x480] sm:$0xff]
      %v838 = vld [vmem:[#allocation9 + $0x488] sm:$0xff]
      %v839 = vld [vmem:[#allocation9 + $0x490] sm:$0xff]
      %v840 = vld [vmem:[#allocation9 + $0x498] sm:$0xff]
      %v841 = vld [vmem:[#allocation9 + $0x4a0] sm:$0xff]
      %v842 = vld [vmem:[#allocation9 + $0x4a8] sm:$0xff]
      %v843 = vld [vmem:[#allocation9 + $0x4b0] sm:$0xff]
      %v844 = vld [vmem:[#allocation9 + $0x4b8] sm:$0xff]
      %v845 = vld [vmem:[#allocation9 + $0x4c0] sm:$0xff]
      %v846 = vld [vmem:[#allocation9 + $0x4c8] sm:$0xff]
      %v847 = vld [vmem:[#allocation9 + $0x4d0] sm:$0xff]
      %v848 = vld [vmem:[#allocation9 + $0x4d8] sm:$0xff]
      %v849 = vld [vmem:[#allocation9 + $0x4e0] sm:$0xff]
      %v850 = vld [vmem:[#allocation9 + $0x4e8] sm:$0xff]
      %v851 = vld [vmem:[#allocation9 + $0x4f0] sm:$0xff]
      %v852 = vld [vmem:[#allocation9 + $0x4f8] sm:$0xff]
      %v853 = vld [vmem:[#allocation9 + $0x500] sm:$0xff]
      %v854 = vld [vmem:[#allocation9 + $0x508] sm:$0xff]
      %v855 = vld [vmem:[#allocation9 + $0x510] sm:$0xff]
      %v856 = vld [vmem:[#allocation9 + $0x518] sm:$0xff]
      %v857 = vld [vmem:[#allocation9 + $0x520] sm:$0xff]
      %v858 = vld [vmem:[#allocation9 + $0x528] sm:$0xff]
      %v859 = vld [vmem:[#allocation9 + $0x530] sm:$0xff]
      %v860 = vld [vmem:[#allocation9 + $0x538] sm:$0xff]
      %v861 = vld [vmem:[#allocation9 + $0x540] sm:$0xff]
      %v862 = vld [vmem:[#allocation9 + $0x548] sm:$0xff]
      %v863 = vld [vmem:[#allocation9 + $0x550] sm:$0xff]
      %v864 = vld [vmem:[#allocation9 + $0x558] sm:$0xff]
      %v865 = vld [vmem:[#allocation9 + $0x560] sm:$0xff]
      %v866 = vld [vmem:[#allocation9 + $0x568] sm:$0xff]
      %v867 = vld [vmem:[#allocation9 + $0x570] sm:$0xff]
      %v868 = vld [vmem:[#allocation9 + $0x578] sm:$0xff]
      %v869 = vld [vmem:[#allocation9 + $0x580] sm:$0xff]
      %v870 = vld [vmem:[#allocation9 + $0x588] sm:$0xff]
      %v871 = vld [vmem:[#allocation9 + $0x590] sm:$0xff]
      %v872 = vld [vmem:[#allocation9 + $0x598] sm:$0xff]
      %v873 = vld [vmem:[#allocation9 + $0x5a0] sm:$0xff]
      %v874 = vld [vmem:[#allocation9 + $0x5a8] sm:$0xff]
      %v875 = vld [vmem:[#allocation9 + $0x5b0] sm:$0xff]
      %v876 = vld [vmem:[#allocation9 + $0x5b8] sm:$0xff]
      %v877 = vld [vmem:[#allocation9 + $0x5c0] sm:$0xff]
      %v878 = vld [vmem:[#allocation9 + $0x5c8] sm:$0xff]
      %v879 = vld [vmem:[#allocation9 + $0x5d0] sm:$0xff]
      %v880 = vld [vmem:[#allocation9 + $0x5d8] sm:$0xff]
      %v881 = vld [vmem:[#allocation9 + $0x5e0] sm:$0xff]
      %v882 = vld [vmem:[#allocation9 + $0x5e8] sm:$0xff]
      %v883 = vld [vmem:[#allocation9 + $0x5f0] sm:$0xff]
      %v884 = vld [vmem:[#allocation9 + $0x5f8] sm:$0xff]
      %v885 = vld [vmem:[#allocation9 + $0x600] sm:$0xff]
      %v886 = vld [vmem:[#allocation9 + $0x608] sm:$0xff]
      %v887 = vld [vmem:[#allocation9 + $0x610] sm:$0xff]
      %v888 = vld [vmem:[#allocation9 + $0x618] sm:$0xff]
      %v889 = vld [vmem:[#allocation9 + $0x620] sm:$0xff]
      %v890 = vld [vmem:[#allocation9 + $0x628] sm:$0xff]
      %v891 = vld [vmem:[#allocation9 + $0x630] sm:$0xff]
      %v892 = vld [vmem:[#allocation9 + $0x638] sm:$0xff]
      %v893 = vld [vmem:[#allocation9 + $0x640] sm:$0xff]
      %v894 = vld [vmem:[#allocation9 + $0x648] sm:$0xff]
      %v895 = vld [vmem:[#allocation9 + $0x650] sm:$0xff]
      %v896 = vld [vmem:[#allocation9 + $0x658] sm:$0xff]
      %v897 = vld [vmem:[#allocation9 + $0x660] sm:$0xff]
      %v898 = vld [vmem:[#allocation9 + $0x668] sm:$0xff]
      %v899 = vld [vmem:[#allocation9 + $0x670] sm:$0xff]
      %v900 = vld [vmem:[#allocation9 + $0x678] sm:$0xff]
      %v901 = vld [vmem:[#allocation9 + $0x680] sm:$0xff]
      %v902 = vld [vmem:[#allocation9 + $0x688] sm:$0xff]
      %v903 = vld [vmem:[#allocation9 + $0x690] sm:$0xff]
      %v904 = vld [vmem:[#allocation9 + $0x698] sm:$0xff]
      %v905 = vld [vmem:[#allocation9 + $0x6a0] sm:$0xff]
      %v906 = vld [vmem:[#allocation9 + $0x6a8] sm:$0xff]
      %v907 = vld [vmem:[#allocation9 + $0x6b0] sm:$0xff]
      %v908 = vld [vmem:[#allocation9 + $0x6b8] sm:$0xff]
      %v909 = vld [vmem:[#allocation9 + $0x6c0] sm:$0xff]
      %v910 = vld [vmem:[#allocation9 + $0x6c8] sm:$0xff]
      %v911 = vld [vmem:[#allocation9 + $0x6d0] sm:$0xff]
      %v912 = vld [vmem:[#allocation9 + $0x6d8] sm:$0xff]
      %v913 = vld [vmem:[#allocation9 + $0x6e0] sm:$0xff]
      %v914 = vld [vmem:[#allocation9 + $0x6e8] sm:$0xff]
      %v915 = vld [vmem:[#allocation9 + $0x6f0] sm:$0xff]
      %v916 = vld [vmem:[#allocation9 + $0x6f8] sm:$0xff]
      %v917 = vld [vmem:[#allocation9 + $0x700] sm:$0xff]
      %v918 = vld [vmem:[#allocation9 + $0x708] sm:$0xff]
      %v919 = vld [vmem:[#allocation9 + $0x710] sm:$0xff]
      %v920 = vld [vmem:[#allocation9 + $0x718] sm:$0xff]
      %v921 = vld [vmem:[#allocation9 + $0x720] sm:$0xff]
      %v922 = vld [vmem:[#allocation9 + $0x728] sm:$0xff]
      %v923 = vld [vmem:[#allocation9 + $0x730] sm:$0xff]
      %v924 = vld [vmem:[#allocation9 + $0x738] sm:$0xff]
      %v925 = vld [vmem:[#allocation9 + $0x740] sm:$0xff]
      %v926 = vld [vmem:[#allocation9 + $0x748] sm:$0xff]
      %v927 = vld [vmem:[#allocation9 + $0x750] sm:$0xff]
      %v928 = vld [vmem:[#allocation9 + $0x758] sm:$0xff]
      %v929 = vld [vmem:[#allocation9 + $0x760] sm:$0xff]
      %v930 = vld [vmem:[#allocation9 + $0x768] sm:$0xff]
      %v931 = vld [vmem:[#allocation9 + $0x770] sm:$0xff]
      %v932 = vld [vmem:[#allocation9 + $0x778] sm:$0xff]
      %v933 = vld [vmem:[#allocation9 + $0x780] sm:$0xff]
      %v934 = vld [vmem:[#allocation9 + $0x788] sm:$0xff]
      %v935 = vld [vmem:[#allocation9 + $0x790] sm:$0xff]
      %v936 = vld [vmem:[#allocation9 + $0x798] sm:$0xff]
      %v937 = vld [vmem:[#allocation9 + $0x7a0] sm:$0xff]
      %v938 = vld [vmem:[#allocation9 + $0x7a8] sm:$0xff]
      %v939 = vld [vmem:[#allocation9 + $0x7b0] sm:$0xff]
      %v940 = vld [vmem:[#allocation9 + $0x7b8] sm:$0xff]
      %v941 = vld [vmem:[#allocation9 + $0x7c0] sm:$0xff]
      %v942 = vld [vmem:[#allocation9 + $0x7c8] sm:$0xff]
      %v943 = vld [vmem:[#allocation9 + $0x7d0] sm:$0xff]
      %v944 = vld [vmem:[#allocation9 + $0x7d8] sm:$0xff]
      %v945 = vld [vmem:[#allocation9 + $0x7e0] sm:$0xff]
      %v946 = vld [vmem:[#allocation9 + $0x7e8] sm:$0xff]
      %v947 = vld [vmem:[#allocation9 + $0x7f0] sm:$0xff]
      %v948 = vld [vmem:[#allocation9 + $0x7f8] sm:$0xff]
      %v949 = vld [vmem:[#allocation11] sm:$0xf]
      %v951 = vperm.slane %v949, 0
      %v952 = vperm.slane %v949, 1
      %v953 = vperm.slane %v949, 2
      %v954 = vperm.slane %v949, 3
      %v1215 = vunpack.c.l.b16 %v693
      %v1216 = vunpack.c.h.b16 %v693
      %v1217 = vunpack.c.l.b16 %v694
      %v1218 = vunpack.c.h.b16 %v694
      %v1219 = vunpack.c.l.b16 %v695
      %v1220 = vunpack.c.h.b16 %v695
      %v1221 = vunpack.c.l.b16 %v696
      %v1222 = vunpack.c.h.b16 %v696
      %v1223 = vunpack.c.l.b16 %v697
      %v1224 = vunpack.c.h.b16 %v697
      %v1225 = vunpack.c.l.b16 %v698
      %v1226 = vunpack.c.h.b16 %v698
      %v1227 = vunpack.c.l.b16 %v699
      %v1228 = vunpack.c.h.b16 %v699
      %v1229 = vunpack.c.l.b16 %v700
      %v1230 = vunpack.c.h.b16 %v700
      %v1231 = vunpack.c.l.b16 %v701
      %v1232 = vunpack.c.h.b16 %v701
      %v1233 = vunpack.c.l.b16 %v702
      %v1234 = vunpack.c.h.b16 %v702
      %v1235 = vunpack.c.l.b16 %v703
      %v1236 = vunpack.c.h.b16 %v703
      %v1237 = vunpack.c.l.b16 %v704
      %v1238 = vunpack.c.h.b16 %v704
      %v1239 = vunpack.c.l.b16 %v705
      %v1240 = vunpack.c.h.b16 %v705
      %v1241 = vunpack.c.l.b16 %v706
      %v1242 = vunpack.c.h.b16 %v706
      %v1243 = vunpack.c.l.b16 %v707
      %v1244 = vunpack.c.h.b16 %v707
      %v1245 = vunpack.c.l.b16 %v708
      %v1246 = vunpack.c.h.b16 %v708
      %v1247 = vunpack.c.l.b16 %v709
      %v1248 = vunpack.c.h.b16 %v709
      %v1249 = vunpack.c.l.b16 %v710
      %v1250 = vunpack.c.h.b16 %v710
      %v1251 = vunpack.c.l.b16 %v711
      %v1252 = vunpack.c.h.b16 %v711
      %v1253 = vunpack.c.l.b16 %v712
      %v1254 = vunpack.c.h.b16 %v712
      %v1255 = vunpack.c.l.b16 %v713
      %v1256 = vunpack.c.h.b16 %v713
      %v1257 = vunpack.c.l.b16 %v714
      %v1258 = vunpack.c.h.b16 %v714
      %v1259 = vunpack.c.l.b16 %v715
      %v1260 = vunpack.c.h.b16 %v715
      %v1261 = vunpack.c.l.b16 %v716
      %v1262 = vunpack.c.h.b16 %v716
      %v1263 = vunpack.c.l.b16 %v717
      %v1264 = vunpack.c.h.b16 %v717
      %v1265 = vunpack.c.l.b16 %v718
      %v1266 = vunpack.c.h.b16 %v718
      %v1267 = vunpack.c.l.b16 %v719
      %v1268 = vunpack.c.h.b16 %v719
      %v1269 = vunpack.c.l.b16 %v720
      %v1270 = vunpack.c.h.b16 %v720
      %v1271 = vunpack.c.l.b16 %v721
      %v1272 = vunpack.c.h.b16 %v721
      %v1273 = vunpack.c.l.b16 %v722
      %v1274 = vunpack.c.h.b16 %v722
      %v1275 = vunpack.c.l.b16 %v723
      %v1276 = vunpack.c.h.b16 %v723
      %v1277 = vunpack.c.l.b16 %v724
      %v1278 = vunpack.c.h.b16 %v724
      %v1279 = vunpack.c.l.b16 %v725
      %v1280 = vunpack.c.h.b16 %v725
      %v1281 = vunpack.c.l.b16 %v726
      %v1282 = vunpack.c.h.b16 %v726
      %v1283 = vunpack.c.l.b16 %v727
      %v1284 = vunpack.c.h.b16 %v727
      %v1285 = vunpack.c.l.b16 %v728
      %v1286 = vunpack.c.h.b16 %v728
      %v1287 = vunpack.c.l.b16 %v729
      %v1288 = vunpack.c.h.b16 %v729
      %v1289 = vunpack.c.l.b16 %v730
      %v1290 = vunpack.c.h.b16 %v730
      %v1291 = vunpack.c.l.b16 %v731
      %v1292 = vunpack.c.h.b16 %v731
      %v1293 = vunpack.c.l.b16 %v732
      %v1294 = vunpack.c.h.b16 %v732
      %v1295 = vunpack.c.l.b16 %v733
      %v1296 = vunpack.c.h.b16 %v733
      %v1297 = vunpack.c.l.b16 %v734
      %v1298 = vunpack.c.h.b16 %v734
      %v1299 = vunpack.c.l.b16 %v735
      %v1300 = vunpack.c.h.b16 %v735
      %v1301 = vunpack.c.l.b16 %v736
      %v1302 = vunpack.c.h.b16 %v736
      %v1303 = vunpack.c.l.b16 %v737
      %v1304 = vunpack.c.h.b16 %v737
      %v1305 = vunpack.c.l.b16 %v738
      %v1306 = vunpack.c.h.b16 %v738
      %v1307 = vunpack.c.l.b16 %v739
      %v1308 = vunpack.c.h.b16 %v739
      %v1309 = vunpack.c.l.b16 %v740
      %v1310 = vunpack.c.h.b16 %v740
      %v1311 = vunpack.c.l.b16 %v741
      %v1312 = vunpack.c.h.b16 %v741
      %v1313 = vunpack.c.l.b16 %v742
      %v1314 = vunpack.c.h.b16 %v742
      %v1315 = vunpack.c.l.b16 %v743
      %v1316 = vunpack.c.h.b16 %v743
      %v1317 = vunpack.c.l.b16 %v744
      %v1318 = vunpack.c.h.b16 %v744
      %v1319 = vunpack.c.l.b16 %v745
      %v1320 = vunpack.c.h.b16 %v745
      %v1321 = vunpack.c.l.b16 %v746
      %v1322 = vunpack.c.h.b16 %v746
      %v1323 = vunpack.c.l.b16 %v747
      %v1324 = vunpack.c.h.b16 %v747
      %v1325 = vunpack.c.l.b16 %v748
      %v1326 = vunpack.c.h.b16 %v748
      %v1327 = vunpack.c.l.b16 %v749
      %v1328 = vunpack.c.h.b16 %v749
      %v1329 = vunpack.c.l.b16 %v750
      %v1330 = vunpack.c.h.b16 %v750
      %v1331 = vunpack.c.l.b16 %v751
      %v1332 = vunpack.c.h.b16 %v751
      %v1333 = vunpack.c.l.b16 %v752
      %v1334 = vunpack.c.h.b16 %v752
      %v1335 = vunpack.c.l.b16 %v753
      %v1336 = vunpack.c.h.b16 %v753
      %v1337 = vunpack.c.l.b16 %v754
      %v1338 = vunpack.c.h.b16 %v754
      %v1339 = vunpack.c.l.b16 %v755
      %v1340 = vunpack.c.h.b16 %v755
      %v1341 = vunpack.c.l.b16 %v756
      %v1342 = vunpack.c.h.b16 %v756
      %v1343 = vunpack.c.l.b16 %v757
      %v1344 = vunpack.c.h.b16 %v757
      %v1345 = vunpack.c.l.b16 %v758
      %v1346 = vunpack.c.h.b16 %v758
      %v1347 = vunpack.c.l.b16 %v759
      %v1348 = vunpack.c.h.b16 %v759
      %v1349 = vunpack.c.l.b16 %v760
      %v1350 = vunpack.c.h.b16 %v760
      %v1351 = vunpack.c.l.b16 %v761
      %v1352 = vunpack.c.h.b16 %v761
      %v1353 = vunpack.c.l.b16 %v762
      %v1354 = vunpack.c.h.b16 %v762
      %v1355 = vunpack.c.l.b16 %v763
      %v1356 = vunpack.c.h.b16 %v763
      %v1357 = vunpack.c.l.b16 %v764
      %v1358 = vunpack.c.h.b16 %v764
      %v1359 = vunpack.c.l.b16 %v765
      %v1360 = vunpack.c.h.b16 %v765
      %v1361 = vunpack.c.l.b16 %v766
      %v1362 = vunpack.c.h.b16 %v766
      %v1363 = vunpack.c.l.b16 %v767
      %v1364 = vunpack.c.h.b16 %v767
      %v1365 = vunpack.c.l.b16 %v768
      %v1366 = vunpack.c.h.b16 %v768
      %v1367 = vunpack.c.l.b16 %v769
      %v1368 = vunpack.c.h.b16 %v769
      %v1369 = vunpack.c.l.b16 %v770
      %v1370 = vunpack.c.h.b16 %v770
      %v1371 = vunpack.c.l.b16 %v771
      %v1372 = vunpack.c.h.b16 %v771
      %v1373 = vunpack.c.l.b16 %v772
      %v1374 = vunpack.c.h.b16 %v772
      %v1375 = vunpack.c.l.b16 %v773
      %v1376 = vunpack.c.h.b16 %v773
      %v1377 = vunpack.c.l.b16 %v774
      %v1378 = vunpack.c.h.b16 %v774
      %v1379 = vunpack.c.l.b16 %v775
      %v1380 = vunpack.c.h.b16 %v775
      %v1381 = vunpack.c.l.b16 %v776
      %v1382 = vunpack.c.h.b16 %v776
      %v1383 = vunpack.c.l.b16 %v777
      %v1384 = vunpack.c.h.b16 %v777
      %v1385 = vunpack.c.l.b16 %v778
      %v1386 = vunpack.c.h.b16 %v778
      %v1387 = vunpack.c.l.b16 %v779
      %v1388 = vunpack.c.h.b16 %v779
      %v1389 = vunpack.c.l.b16 %v780
      %v1390 = vunpack.c.h.b16 %v780
      %v1391 = vunpack.c.l.b16 %v781
      %v1392 = vunpack.c.h.b16 %v781
      %v1393 = vunpack.c.l.b16 %v782
      %v1394 = vunpack.c.h.b16 %v782
      %v1395 = vunpack.c.l.b16 %v783
      %v1396 = vunpack.c.h.b16 %v783
      %v1397 = vunpack.c.l.b16 %v784
      %v1398 = vunpack.c.h.b16 %v784
      %v1399 = vunpack.c.l.b16 %v785
      %v1400 = vunpack.c.h.b16 %v785
      %v1401 = vunpack.c.l.b16 %v786
      %v1402 = vunpack.c.h.b16 %v786
      %v1403 = vunpack.c.l.b16 %v787
      %v1404 = vunpack.c.h.b16 %v787
      %v1405 = vunpack.c.l.b16 %v788
      %v1406 = vunpack.c.h.b16 %v788
      %v1407 = vunpack.c.l.b16 %v789
      %v1408 = vunpack.c.h.b16 %v789
      %v1409 = vunpack.c.l.b16 %v790
      %v1410 = vunpack.c.h.b16 %v790
      %v1411 = vunpack.c.l.b16 %v791
      %v1412 = vunpack.c.h.b16 %v791
      %v1413 = vunpack.c.l.b16 %v792
      %v1414 = vunpack.c.h.b16 %v792
      %v1415 = vunpack.c.l.b16 %v793
      %v1416 = vunpack.c.h.b16 %v793
      %v1417 = vunpack.c.l.b16 %v794
      %v1418 = vunpack.c.h.b16 %v794
      %v1419 = vunpack.c.l.b16 %v795
      %v1420 = vunpack.c.h.b16 %v795
      %v1421 = vunpack.c.l.b16 %v796
      %v1422 = vunpack.c.h.b16 %v796
      %v1423 = vunpack.c.l.b16 %v797
      %v1424 = vunpack.c.h.b16 %v797
      %v1425 = vunpack.c.l.b16 %v798
      %v1426 = vunpack.c.h.b16 %v798
      %v1427 = vunpack.c.l.b16 %v799
      %v1428 = vunpack.c.h.b16 %v799
      %v1429 = vunpack.c.l.b16 %v800
      %v1430 = vunpack.c.h.b16 %v800
      %v1431 = vunpack.c.l.b16 %v801
      %v1432 = vunpack.c.h.b16 %v801
      %v1433 = vunpack.c.l.b16 %v802
      %v1434 = vunpack.c.h.b16 %v802
      %v1435 = vunpack.c.l.b16 %v803
      %v1436 = vunpack.c.h.b16 %v803
      %v1437 = vunpack.c.l.b16 %v804
      %v1438 = vunpack.c.h.b16 %v804
      %v1439 = vunpack.c.l.b16 %v805
      %v1440 = vunpack.c.h.b16 %v805
      %v1441 = vunpack.c.l.b16 %v806
      %v1442 = vunpack.c.h.b16 %v806
      %v1443 = vunpack.c.l.b16 %v807
      %v1444 = vunpack.c.h.b16 %v807
      %v1445 = vunpack.c.l.b16 %v808
      %v1446 = vunpack.c.h.b16 %v808
      %v1447 = vunpack.c.l.b16 %v809
      %v1448 = vunpack.c.h.b16 %v809
      %v1449 = vunpack.c.l.b16 %v810
      %v1450 = vunpack.c.h.b16 %v810
      %v1451 = vunpack.c.l.b16 %v811
      %v1452 = vunpack.c.h.b16 %v811
      %v1453 = vunpack.c.l.b16 %v812
      %v1454 = vunpack.c.h.b16 %v812
      %v1455 = vunpack.c.l.b16 %v813
      %v1456 = vunpack.c.h.b16 %v813
      %v1457 = vunpack.c.l.b16 %v814
      %v1458 = vunpack.c.h.b16 %v814
      %v1459 = vunpack.c.l.b16 %v815
      %v1460 = vunpack.c.h.b16 %v815
      %v1461 = vunpack.c.l.b16 %v816
      %v1462 = vunpack.c.h.b16 %v816
      %v1463 = vunpack.c.l.b16 %v817
      %v1464 = vunpack.c.h.b16 %v817
      %v1465 = vunpack.c.l.b16 %v818
      %v1466 = vunpack.c.h.b16 %v818
      %v1467 = vunpack.c.l.b16 %v819
      %v1468 = vunpack.c.h.b16 %v819
      %v1469 = vunpack.c.l.b16 %v820
      %v1470 = vunpack.c.h.b16 %v820
      %v1471 = vunpack.c.l.b16 %v821
      %v1472 = vunpack.c.h.b16 %v821
      %v1473 = vunpack.c.l.b16 %v822
      %v1474 = vunpack.c.h.b16 %v822
      %v1475 = vunpack.c.l.b16 %v823
      %v1476 = vunpack.c.h.b16 %v823
      %v1477 = vunpack.c.l.b16 %v824
      %v1478 = vunpack.c.h.b16 %v824
      %v1479 = vunpack.c.l.b16 %v825
      %v1480 = vunpack.c.h.b16 %v825
      %v1481 = vunpack.c.l.b16 %v826
      %v1482 = vunpack.c.h.b16 %v826
      %v1483 = vunpack.c.l.b16 %v827
      %v1484 = vunpack.c.h.b16 %v827
      %v1485 = vunpack.c.l.b16 %v828
      %v1486 = vunpack.c.h.b16 %v828
      %v1487 = vunpack.c.l.b16 %v829
      %v1488 = vunpack.c.h.b16 %v829
      %v1489 = vunpack.c.l.b16 %v830
      %v1490 = vunpack.c.h.b16 %v830
      %v1491 = vunpack.c.l.b16 %v831
      %v1492 = vunpack.c.h.b16 %v831
      %v1493 = vunpack.c.l.b16 %v832
      %v1494 = vunpack.c.h.b16 %v832
      %v1495 = vunpack.c.l.b16 %v833
      %v1496 = vunpack.c.h.b16 %v833
      %v1497 = vunpack.c.l.b16 %v834
      %v1498 = vunpack.c.h.b16 %v834
      %v1499 = vunpack.c.l.b16 %v835
      %v1500 = vunpack.c.h.b16 %v835
      %v1501 = vunpack.c.l.b16 %v836
      %v1502 = vunpack.c.h.b16 %v836
      %v1503 = vunpack.c.l.b16 %v837
      %v1504 = vunpack.c.h.b16 %v837
      %v1505 = vunpack.c.l.b16 %v838
      %v1506 = vunpack.c.h.b16 %v838
      %v1507 = vunpack.c.l.b16 %v839
      %v1508 = vunpack.c.h.b16 %v839
      %v1509 = vunpack.c.l.b16 %v840
      %v1510 = vunpack.c.h.b16 %v840
      %v1511 = vunpack.c.l.b16 %v841
      %v1512 = vunpack.c.h.b16 %v841
      %v1513 = vunpack.c.l.b16 %v842
      %v1514 = vunpack.c.h.b16 %v842
      %v1515 = vunpack.c.l.b16 %v843
      %v1516 = vunpack.c.h.b16 %v843
      %v1517 = vunpack.c.l.b16 %v844
      %v1518 = vunpack.c.h.b16 %v844
      %v1519 = vunpack.c.l.b16 %v845
      %v1520 = vunpack.c.h.b16 %v845
      %v1521 = vunpack.c.l.b16 %v846
      %v1522 = vunpack.c.h.b16 %v846
      %v1523 = vunpack.c.l.b16 %v847
      %v1524 = vunpack.c.h.b16 %v847
      %v1525 = vunpack.c.l.b16 %v848
      %v1526 = vunpack.c.h.b16 %v848
      %v1527 = vunpack.c.l.b16 %v849
      %v1528 = vunpack.c.h.b16 %v849
      %v1529 = vunpack.c.l.b16 %v850
      %v1530 = vunpack.c.h.b16 %v850
      %v1531 = vunpack.c.l.b16 %v851
      %v1532 = vunpack.c.h.b16 %v851
      %v1533 = vunpack.c.l.b16 %v852
      %v1534 = vunpack.c.h.b16 %v852
      %v1535 = vunpack.c.l.b16 %v853
      %v1536 = vunpack.c.h.b16 %v853
      %v1537 = vunpack.c.l.b16 %v854
      %v1538 = vunpack.c.h.b16 %v854
      %v1539 = vunpack.c.l.b16 %v855
      %v1540 = vunpack.c.h.b16 %v855
      %v1541 = vunpack.c.l.b16 %v856
      %v1542 = vunpack.c.h.b16 %v856
      %v1543 = vunpack.c.l.b16 %v857
      %v1544 = vunpack.c.h.b16 %v857
      %v1545 = vunpack.c.l.b16 %v858
      %v1546 = vunpack.c.h.b16 %v858
      %v1547 = vunpack.c.l.b16 %v859
      %v1548 = vunpack.c.h.b16 %v859
      %v1549 = vunpack.c.l.b16 %v860
      %v1550 = vunpack.c.h.b16 %v860
      %v1551 = vunpack.c.l.b16 %v861
      %v1552 = vunpack.c.h.b16 %v861
      %v1553 = vunpack.c.l.b16 %v862
      %v1554 = vunpack.c.h.b16 %v862
      %v1555 = vunpack.c.l.b16 %v863
      %v1556 = vunpack.c.h.b16 %v863
      %v1557 = vunpack.c.l.b16 %v864
      %v1558 = vunpack.c.h.b16 %v864
      %v1559 = vunpack.c.l.b16 %v865
      %v1560 = vunpack.c.h.b16 %v865
      %v1561 = vunpack.c.l.b16 %v866
      %v1562 = vunpack.c.h.b16 %v866
      %v1563 = vunpack.c.l.b16 %v867
      %v1564 = vunpack.c.h.b16 %v867
      %v1565 = vunpack.c.l.b16 %v868
      %v1566 = vunpack.c.h.b16 %v868
      %v1567 = vunpack.c.l.b16 %v869
      %v1568 = vunpack.c.h.b16 %v869
      %v1569 = vunpack.c.l.b16 %v870
      %v1570 = vunpack.c.h.b16 %v870
      %v1571 = vunpack.c.l.b16 %v871
      %v1572 = vunpack.c.h.b16 %v871
      %v1573 = vunpack.c.l.b16 %v872
      %v1574 = vunpack.c.h.b16 %v872
      %v1575 = vunpack.c.l.b16 %v873
      %v1576 = vunpack.c.h.b16 %v873
      %v1577 = vunpack.c.l.b16 %v874
      %v1578 = vunpack.c.h.b16 %v874
      %v1579 = vunpack.c.l.b16 %v875
      %v1580 = vunpack.c.h.b16 %v875
      %v1581 = vunpack.c.l.b16 %v876
      %v1582 = vunpack.c.h.b16 %v876
      %v1583 = vunpack.c.l.b16 %v877
      %v1584 = vunpack.c.h.b16 %v877
      %v1585 = vunpack.c.l.b16 %v878
      %v1586 = vunpack.c.h.b16 %v878
      %v1587 = vunpack.c.l.b16 %v879
      %v1588 = vunpack.c.h.b16 %v879
      %v1589 = vunpack.c.l.b16 %v880
      %v1590 = vunpack.c.h.b16 %v880
      %v1591 = vunpack.c.l.b16 %v881
      %v1592 = vunpack.c.h.b16 %v881
      %v1593 = vunpack.c.l.b16 %v882
      %v1594 = vunpack.c.h.b16 %v882
      %v1595 = vunpack.c.l.b16 %v883
      %v1596 = vunpack.c.h.b16 %v883
      %v1597 = vunpack.c.l.b16 %v884
      %v1598 = vunpack.c.h.b16 %v884
      %v1599 = vunpack.c.l.b16 %v885
      %v1600 = vunpack.c.h.b16 %v885
      %v1601 = vunpack.c.l.b16 %v886
      %v1602 = vunpack.c.h.b16 %v886
      %v1603 = vunpack.c.l.b16 %v887
      %v1604 = vunpack.c.h.b16 %v887
      %v1605 = vunpack.c.l.b16 %v888
      %v1606 = vunpack.c.h.b16 %v888
      %v1607 = vunpack.c.l.b16 %v889
      %v1608 = vunpack.c.h.b16 %v889
      %v1609 = vunpack.c.l.b16 %v890
      %v1610 = vunpack.c.h.b16 %v890
      %v1611 = vunpack.c.l.b16 %v891
      %v1612 = vunpack.c.h.b16 %v891
      %v1613 = vunpack.c.l.b16 %v892
      %v1614 = vunpack.c.h.b16 %v892
      %v1615 = vunpack.c.l.b16 %v893
      %v1616 = vunpack.c.h.b16 %v893
      %v1617 = vunpack.c.l.b16 %v894
      %v1618 = vunpack.c.h.b16 %v894
      %v1619 = vunpack.c.l.b16 %v895
      %v1620 = vunpack.c.h.b16 %v895
      %v1621 = vunpack.c.l.b16 %v896
      %v1622 = vunpack.c.h.b16 %v896
      %v1623 = vunpack.c.l.b16 %v897
      %v1624 = vunpack.c.h.b16 %v897
      %v1625 = vunpack.c.l.b16 %v898
      %v1626 = vunpack.c.h.b16 %v898
      %v1627 = vunpack.c.l.b16 %v899
      %v1628 = vunpack.c.h.b16 %v899
      %v1629 = vunpack.c.l.b16 %v900
      %v1630 = vunpack.c.h.b16 %v900
      %v1631 = vunpack.c.l.b16 %v901
      %v1632 = vunpack.c.h.b16 %v901
      %v1633 = vunpack.c.l.b16 %v902
      %v1634 = vunpack.c.h.b16 %v902
      %v1635 = vunpack.c.l.b16 %v903
      %v1636 = vunpack.c.h.b16 %v903
      %v1637 = vunpack.c.l.b16 %v904
      %v1638 = vunpack.c.h.b16 %v904
      %v1639 = vunpack.c.l.b16 %v905
      %v1640 = vunpack.c.h.b16 %v905
      %v1641 = vunpack.c.l.b16 %v906
      %v1642 = vunpack.c.h.b16 %v906
      %v1643 = vunpack.c.l.b16 %v907
      %v1644 = vunpack.c.h.b16 %v907
      %v1645 = vunpack.c.l.b16 %v908
      %v1646 = vunpack.c.h.b16 %v908
      %v1647 = vunpack.c.l.b16 %v909
      %v1648 = vunpack.c.h.b16 %v909
      %v1649 = vunpack.c.l.b16 %v910
      %v1650 = vunpack.c.h.b16 %v910
      %v1651 = vunpack.c.l.b16 %v911
      %v1652 = vunpack.c.h.b16 %v911
      %v1653 = vunpack.c.l.b16 %v912
      %v1654 = vunpack.c.h.b16 %v912
      %v1655 = vunpack.c.l.b16 %v913
      %v1656 = vunpack.c.h.b16 %v913
      %v1657 = vunpack.c.l.b16 %v914
      %v1658 = vunpack.c.h.b16 %v914
      %v1659 = vunpack.c.l.b16 %v915
      %v1660 = vunpack.c.h.b16 %v915
      %v1661 = vunpack.c.l.b16 %v916
      %v1662 = vunpack.c.h.b16 %v916
      %v1663 = vunpack.c.l.b16 %v917
      %v1664 = vunpack.c.h.b16 %v917
      %v1665 = vunpack.c.l.b16 %v918
      %v1666 = vunpack.c.h.b16 %v918
      %v1667 = vunpack.c.l.b16 %v919
      %v1668 = vunpack.c.h.b16 %v919
      %v1669 = vunpack.c.l.b16 %v920
      %v1670 = vunpack.c.h.b16 %v920
      %v1671 = vunpack.c.l.b16 %v921
      %v1672 = vunpack.c.h.b16 %v921
      %v1673 = vunpack.c.l.b16 %v922
      %v1674 = vunpack.c.h.b16 %v922
      %v1675 = vunpack.c.l.b16 %v923
      %v1676 = vunpack.c.h.b16 %v923
      %v1677 = vunpack.c.l.b16 %v924
      %v1678 = vunpack.c.h.b16 %v924
      %v1679 = vunpack.c.l.b16 %v925
      %v1680 = vunpack.c.h.b16 %v925
      %v1681 = vunpack.c.l.b16 %v926
      %v1682 = vunpack.c.h.b16 %v926
      %v1683 = vunpack.c.l.b16 %v927
      %v1684 = vunpack.c.h.b16 %v927
      %v1685 = vunpack.c.l.b16 %v928
      %v1686 = vunpack.c.h.b16 %v928
      %v1687 = vunpack.c.l.b16 %v929
      %v1688 = vunpack.c.h.b16 %v929
      %v1689 = vunpack.c.l.b16 %v930
      %v1690 = vunpack.c.h.b16 %v930
      %v1691 = vunpack.c.l.b16 %v931
      %v1692 = vunpack.c.h.b16 %v931
      %v1693 = vunpack.c.l.b16 %v932
      %v1694 = vunpack.c.h.b16 %v932
      %v1695 = vunpack.c.l.b16 %v933
      %v1696 = vunpack.c.h.b16 %v933
      %v1697 = vunpack.c.l.b16 %v934
      %v1698 = vunpack.c.h.b16 %v934
      %v1699 = vunpack.c.l.b16 %v935
      %v1700 = vunpack.c.h.b16 %v935
      %v1701 = vunpack.c.l.b16 %v936
      %v1702 = vunpack.c.h.b16 %v936
      %v1703 = vunpack.c.l.b16 %v937
      %v1704 = vunpack.c.h.b16 %v937
      %v1705 = vunpack.c.l.b16 %v938
      %v1706 = vunpack.c.h.b16 %v938
      %v1707 = vunpack.c.l.b16 %v939
      %v1708 = vunpack.c.h.b16 %v939
      %v1709 = vunpack.c.l.b16 %v940
      %v1710 = vunpack.c.h.b16 %v940
      %v1711 = vunpack.c.l.b16 %v941
      %v1712 = vunpack.c.h.b16 %v941
      %v1713 = vunpack.c.l.b16 %v942
      %v1714 = vunpack.c.h.b16 %v942
      %v1715 = vunpack.c.l.b16 %v943
      %v1716 = vunpack.c.h.b16 %v943
      %v1717 = vunpack.c.l.b16 %v944
      %v1718 = vunpack.c.h.b16 %v944
      %v1719 = vunpack.c.l.b16 %v945
      %v1720 = vunpack.c.h.b16 %v945
      %v1721 = vunpack.c.l.b16 %v946
      %v1722 = vunpack.c.h.b16 %v946
      %v1723 = vunpack.c.l.b16 %v947
      %v1724 = vunpack.c.h.b16 %v947
      %v1725 = vunpack.c.l.b16 %v948
      %v1726 = vunpack.c.h.b16 %v948
      %v1727 = vpack.c.b16 %v1219, %v1215
      %v1728 = vpack.c.b16 %v1220, %v1216
      %v1729 = vpack.c.b16 %v1221, %v1217
      %v1730 = vpack.c.b16 %v1222, %v1218
      %v1731 = vpack.c.b16 %v1227, %v1223
      %v1732 = vpack.c.b16 %v1228, %v1224
      %v1733 = vpack.c.b16 %v1229, %v1225
      %v1734 = vpack.c.b16 %v1230, %v1226
      %v1735 = vpack.c.b16 %v1235, %v1231
      %v1736 = vpack.c.b16 %v1236, %v1232
      %v1737 = vpack.c.b16 %v1237, %v1233
      %v1738 = vpack.c.b16 %v1238, %v1234
      %v1739 = vpack.c.b16 %v1243, %v1239
      %v1740 = vpack.c.b16 %v1244, %v1240
      %v1741 = vpack.c.b16 %v1245, %v1241
      %v1742 = vpack.c.b16 %v1246, %v1242
      %v1743 = vpack.c.b16 %v1251, %v1247
      %v1744 = vpack.c.b16 %v1252, %v1248
      %v1745 = vpack.c.b16 %v1253, %v1249
      %v1746 = vpack.c.b16 %v1254, %v1250
      %v1747 = vpack.c.b16 %v1259, %v1255
      %v1748 = vpack.c.b16 %v1260, %v1256
      %v1749 = vpack.c.b16 %v1261, %v1257
      %v1750 = vpack.c.b16 %v1262, %v1258
      %v1751 = vpack.c.b16 %v1267, %v1263
      %v1752 = vpack.c.b16 %v1268, %v1264
      %v1753 = vpack.c.b16 %v1269, %v1265
      %v1754 = vpack.c.b16 %v1270, %v1266
      %v1755 = vpack.c.b16 %v1275, %v1271
      %v1756 = vpack.c.b16 %v1276, %v1272
      %v1757 = vpack.c.b16 %v1277, %v1273
      %v1758 = vpack.c.b16 %v1278, %v1274
      %v1759 = vpack.c.b16 %v1283, %v1279
      %v1760 = vpack.c.b16 %v1284, %v1280
      %v1761 = vpack.c.b16 %v1285, %v1281
      %v1762 = vpack.c.b16 %v1286, %v1282
      %v1763 = vpack.c.b16 %v1291, %v1287
      %v1764 = vpack.c.b16 %v1292, %v1288
      %v1765 = vpack.c.b16 %v1293, %v1289
      %v1766 = vpack.c.b16 %v1294, %v1290
      %v1767 = vpack.c.b16 %v1299, %v1295
      %v1768 = vpack.c.b16 %v1300, %v1296
      %v1769 = vpack.c.b16 %v1301, %v1297
      %v1770 = vpack.c.b16 %v1302, %v1298
      %v1771 = vpack.c.b16 %v1307, %v1303
      %v1772 = vpack.c.b16 %v1308, %v1304
      %v1773 = vpack.c.b16 %v1309, %v1305
      %v1774 = vpack.c.b16 %v1310, %v1306
      %v1775 = vpack.c.b16 %v1315, %v1311
      %v1776 = vpack.c.b16 %v1316, %v1312
      %v1777 = vpack.c.b16 %v1317, %v1313
      %v1778 = vpack.c.b16 %v1318, %v1314
      %v1779 = vpack.c.b16 %v1323, %v1319
      %v1780 = vpack.c.b16 %v1324, %v1320
      %v1781 = vpack.c.b16 %v1325, %v1321
      %v1782 = vpack.c.b16 %v1326, %v1322
      %v1783 = vpack.c.b16 %v1331, %v1327
      %v1784 = vpack.c.b16 %v1332, %v1328
      %v1785 = vpack.c.b16 %v1333, %v1329
      %v1786 = vpack.c.b16 %v1334, %v1330
      %v1787 = vpack.c.b16 %v1339, %v1335
      %v1788 = vpack.c.b16 %v1340, %v1336
      %v1789 = vpack.c.b16 %v1341, %v1337
      %v1790 = vpack.c.b16 %v1342, %v1338
      %v1791 = vpack.c.b16 %v1347, %v1343
      %v1792 = vpack.c.b16 %v1348, %v1344
      %v1793 = vpack.c.b16 %v1349, %v1345
      %v1794 = vpack.c.b16 %v1350, %v1346
      %v1795 = vpack.c.b16 %v1355, %v1351
      %v1796 = vpack.c.b16 %v1356, %v1352
      %v1797 = vpack.c.b16 %v1357, %v1353
      %v1798 = vpack.c.b16 %v1358, %v1354
      %v1799 = vpack.c.b16 %v1363, %v1359
      %v1800 = vpack.c.b16 %v1364, %v1360
      %v1801 = vpack.c.b16 %v1365, %v1361
      %v1802 = vpack.c.b16 %v1366, %v1362
      %v1803 = vpack.c.b16 %v1371, %v1367
      %v1804 = vpack.c.b16 %v1372, %v1368
      %v1805 = vpack.c.b16 %v1373, %v1369
      %v1806 = vpack.c.b16 %v1374, %v1370
      %v1807 = vpack.c.b16 %v1379, %v1375
      %v1808 = vpack.c.b16 %v1380, %v1376
      %v1809 = vpack.c.b16 %v1381, %v1377
      %v1810 = vpack.c.b16 %v1382, %v1378
      %v1811 = vpack.c.b16 %v1387, %v1383
      %v1812 = vpack.c.b16 %v1388, %v1384
      %v1813 = vpack.c.b16 %v1389, %v1385
      %v1814 = vpack.c.b16 %v1390, %v1386
      %v1815 = vpack.c.b16 %v1395, %v1391
      %v1816 = vpack.c.b16 %v1396, %v1392
      %v1817 = vpack.c.b16 %v1397, %v1393
      %v1818 = vpack.c.b16 %v1398, %v1394
      %v1819 = vpack.c.b16 %v1403, %v1399
      %v1820 = vpack.c.b16 %v1404, %v1400
      %v1821 = vpack.c.b16 %v1405, %v1401
      %v1822 = vpack.c.b16 %v1406, %v1402
      %v1823 = vpack.c.b16 %v1411, %v1407
      %v1824 = vpack.c.b16 %v1412, %v1408
      %v1825 = vpack.c.b16 %v1413, %v1409
      %v1826 = vpack.c.b16 %v1414, %v1410
      %v1827 = vpack.c.b16 %v1419, %v1415
      %v1828 = vpack.c.b16 %v1420, %v1416
      %v1829 = vpack.c.b16 %v1421, %v1417
      %v1830 = vpack.c.b16 %v1422, %v1418
      %v1831 = vpack.c.b16 %v1427, %v1423
      %v1832 = vpack.c.b16 %v1428, %v1424
      %v1833 = vpack.c.b16 %v1429, %v1425
      %v1834 = vpack.c.b16 %v1430, %v1426
      %v1835 = vpack.c.b16 %v1435, %v1431
      %v1836 = vpack.c.b16 %v1436, %v1432
      %v1837 = vpack.c.b16 %v1437, %v1433
      %v1838 = vpack.c.b16 %v1438, %v1434
      %v1839 = vpack.c.b16 %v1443, %v1439
      %v1840 = vpack.c.b16 %v1444, %v1440
      %v1841 = vpack.c.b16 %v1445, %v1441
      %v1842 = vpack.c.b16 %v1446, %v1442
      %v1843 = vpack.c.b16 %v1451, %v1447
      %v1844 = vpack.c.b16 %v1452, %v1448
      %v1845 = vpack.c.b16 %v1453, %v1449
      %v1846 = vpack.c.b16 %v1454, %v1450
      %v1847 = vpack.c.b16 %v1459, %v1455
      %v1848 = vpack.c.b16 %v1460, %v1456
      %v1849 = vpack.c.b16 %v1461, %v1457
      %v1850 = vpack.c.b16 %v1462, %v1458
      %v1851 = vpack.c.b16 %v1467, %v1463
      %v1852 = vpack.c.b16 %v1468, %v1464
      %v1853 = vpack.c.b16 %v1469, %v1465
      %v1854 = vpack.c.b16 %v1470, %v1466
      %v1855 = vpack.c.b16 %v1475, %v1471
      %v1856 = vpack.c.b16 %v1476, %v1472
      %v1857 = vpack.c.b16 %v1477, %v1473
      %v1858 = vpack.c.b16 %v1478, %v1474
      %v1859 = vpack.c.b16 %v1483, %v1479
      %v1860 = vpack.c.b16 %v1484, %v1480
      %v1861 = vpack.c.b16 %v1485, %v1481
      %v1862 = vpack.c.b16 %v1486, %v1482
      %v1863 = vpack.c.b16 %v1491, %v1487
      %v1864 = vpack.c.b16 %v1492, %v1488
      %v1865 = vpack.c.b16 %v1493, %v1489
      %v1866 = vpack.c.b16 %v1494, %v1490
      %v1867 = vpack.c.b16 %v1499, %v1495
      %v1868 = vpack.c.b16 %v1500, %v1496
      %v1869 = vpack.c.b16 %v1501, %v1497
      %v1870 = vpack.c.b16 %v1502, %v1498
      %v1871 = vpack.c.b16 %v1507, %v1503
      %v1872 = vpack.c.b16 %v1508, %v1504
      %v1873 = vpack.c.b16 %v1509, %v1505
      %v1874 = vpack.c.b16 %v1510, %v1506
      %v1875 = vpack.c.b16 %v1515, %v1511
      %v1876 = vpack.c.b16 %v1516, %v1512
      %v1877 = vpack.c.b16 %v1517, %v1513
      %v1878 = vpack.c.b16 %v1518, %v1514
      %v1879 = vpack.c.b16 %v1523, %v1519
      %v1880 = vpack.c.b16 %v1524, %v1520
      %v1881 = vpack.c.b16 %v1525, %v1521
      %v1882 = vpack.c.b16 %v1526, %v1522
      %v1883 = vpack.c.b16 %v1531, %v1527
      %v1884 = vpack.c.b16 %v1532, %v1528
      %v1885 = vpack.c.b16 %v1533, %v1529
      %v1886 = vpack.c.b16 %v1534, %v1530
      %v1887 = vpack.c.b16 %v1539, %v1535
      %v1888 = vpack.c.b16 %v1540, %v1536
      %v1889 = vpack.c.b16 %v1541, %v1537
      %v1890 = vpack.c.b16 %v1542, %v1538
      %v1891 = vpack.c.b16 %v1547, %v1543
      %v1892 = vpack.c.b16 %v1548, %v1544
      %v1893 = vpack.c.b16 %v1549, %v1545
      %v1894 = vpack.c.b16 %v1550, %v1546
      %v1895 = vpack.c.b16 %v1555, %v1551
      %v1896 = vpack.c.b16 %v1556, %v1552
      %v1897 = vpack.c.b16 %v1557, %v1553
      %v1898 = vpack.c.b16 %v1558, %v1554
      %v1899 = vpack.c.b16 %v1563, %v1559
      %v1900 = vpack.c.b16 %v1564, %v1560
      %v1901 = vpack.c.b16 %v1565, %v1561
      %v1902 = vpack.c.b16 %v1566, %v1562
      %v1903 = vpack.c.b16 %v1571, %v1567
      %v1904 = vpack.c.b16 %v1572, %v1568
      %v1905 = vpack.c.b16 %v1573, %v1569
      %v1906 = vpack.c.b16 %v1574, %v1570
      %v1907 = vpack.c.b16 %v1579, %v1575
      %v1908 = vpack.c.b16 %v1580, %v1576
      %v1909 = vpack.c.b16 %v1581, %v1577
      %v1910 = vpack.c.b16 %v1582, %v1578
      %v1911 = vpack.c.b16 %v1587, %v1583
      %v1912 = vpack.c.b16 %v1588, %v1584
      %v1913 = vpack.c.b16 %v1589, %v1585
      %v1914 = vpack.c.b16 %v1590, %v1586
      %v1915 = vpack.c.b16 %v1595, %v1591
      %v1916 = vpack.c.b16 %v1596, %v1592
      %v1917 = vpack.c.b16 %v1597, %v1593
      %v1918 = vpack.c.b16 %v1598, %v1594
      %v1919 = vpack.c.b16 %v1603, %v1599
      %v1920 = vpack.c.b16 %v1604, %v1600
      %v1921 = vpack.c.b16 %v1605, %v1601
      %v1922 = vpack.c.b16 %v1606, %v1602
      %v1923 = vpack.c.b16 %v1611, %v1607
      %v1924 = vpack.c.b16 %v1612, %v1608
      %v1925 = vpack.c.b16 %v1613, %v1609
      %v1926 = vpack.c.b16 %v1614, %v1610
      %v1927 = vpack.c.b16 %v1619, %v1615
      %v1928 = vpack.c.b16 %v1620, %v1616
      %v1929 = vpack.c.b16 %v1621, %v1617
      %v1930 = vpack.c.b16 %v1622, %v1618
      %v1931 = vpack.c.b16 %v1627, %v1623
      %v1932 = vpack.c.b16 %v1628, %v1624
      %v1933 = vpack.c.b16 %v1629, %v1625
      %v1934 = vpack.c.b16 %v1630, %v1626
      %v1935 = vpack.c.b16 %v1635, %v1631
      %v1936 = vpack.c.b16 %v1636, %v1632
      %v1937 = vpack.c.b16 %v1637, %v1633
      %v1938 = vpack.c.b16 %v1638, %v1634
      %v1939 = vpack.c.b16 %v1643, %v1639
      %v1940 = vpack.c.b16 %v1644, %v1640
      %v1941 = vpack.c.b16 %v1645, %v1641
      %v1942 = vpack.c.b16 %v1646, %v1642
      %v1943 = vpack.c.b16 %v1651, %v1647
      %v1944 = vpack.c.b16 %v1652, %v1648
      %v1945 = vpack.c.b16 %v1653, %v1649
      %v1946 = vpack.c.b16 %v1654, %v1650
      %v1947 = vpack.c.b16 %v1659, %v1655
      %v1948 = vpack.c.b16 %v1660, %v1656
      %v1949 = vpack.c.b16 %v1661, %v1657
      %v1950 = vpack.c.b16 %v1662, %v1658
      %v1951 = vpack.c.b16 %v1667, %v1663
      %v1952 = vpack.c.b16 %v1668, %v1664
      %v1953 = vpack.c.b16 %v1669, %v1665
      %v1954 = vpack.c.b16 %v1670, %v1666
      %v1955 = vpack.c.b16 %v1675, %v1671
      %v1956 = vpack.c.b16 %v1676, %v1672
      %v1957 = vpack.c.b16 %v1677, %v1673
      %v1958 = vpack.c.b16 %v1678, %v1674
      %v1959 = vpack.c.b16 %v1683, %v1679
      %v1960 = vpack.c.b16 %v1684, %v1680
      %v1961 = vpack.c.b16 %v1685, %v1681
      %v1962 = vpack.c.b16 %v1686, %v1682
      %v1963 = vpack.c.b16 %v1691, %v1687
      %v1964 = vpack.c.b16 %v1692, %v1688
      %v1965 = vpack.c.b16 %v1693, %v1689
      %v1966 = vpack.c.b16 %v1694, %v1690
      %v1967 = vpack.c.b16 %v1699, %v1695
      %v1968 = vpack.c.b16 %v1700, %v1696
      %v1969 = vpack.c.b16 %v1701, %v1697
      %v1970 = vpack.c.b16 %v1702, %v1698
      %v1971 = vpack.c.b16 %v1707, %v1703
      %v1972 = vpack.c.b16 %v1708, %v1704
      %v1973 = vpack.c.b16 %v1709, %v1705
      %v1974 = vpack.c.b16 %v1710, %v1706
      %v1975 = vpack.c.b16 %v1715, %v1711
      %v1976 = vpack.c.b16 %v1716, %v1712
      %v1977 = vpack.c.b16 %v1717, %v1713
      %v1978 = vpack.c.b16 %v1718, %v1714
      %v1979 = vpack.c.b16 %v1723, %v1719
      %v1980 = vpack.c.b16 %v1724, %v1720
      %v1981 = vpack.c.b16 %v1725, %v1721
      %v1982 = vpack.c.b16 %v1726, %v1722
      %2239 = vmatpush.bf16.msra.mxu0 %v1755
      %2240 = vmatpush.bf16.msra.mxu0 %v1751
      %2241 = vmatpush.bf16.msra.mxu0 %v1747
      %2242 = vmatpush.bf16.msra.mxu0 %v1743
      %2243 = vmatpush.bf16.msra.mxu0 %v1739
      %2244 = vmatpush.bf16.msra.mxu0 %v1735
      %2245 = vmatpush.bf16.msra.mxu0 %v1731
      %2246 = vmatpush.bf16.msra.mxu0 %v1727
      %2247 = vmatmul.bf16.gmra.mxu0 %v685
      %v2248 = vpop.f32.mrf.mxu0
      %v2249 = vadd.f32 %v951, %v2248
      %v2250 = vpop.f32.mrf.mxu0
      %2251 = vdwg.mxu0
      %2252 = vmatpush.bf16.msra.mxu0 %v1787
      %2253 = vmatpush.bf16.msra.mxu0 %v1783
      %2254 = vmatpush.bf16.msra.mxu0 %v1779
      %2255 = vmatpush.bf16.msra.mxu0 %v1775
      %2256 = vmatpush.bf16.msra.mxu0 %v1771
      %2257 = vmatpush.bf16.msra.mxu0 %v1767
      %2258 = vmatpush.bf16.msra.mxu0 %v1763
      %2259 = vmatpush.bf16.msra.mxu0 %v1759
      %2260 = vmatmul.bf16.gmra.mxu0 %v686
      %v2261 = vpop.f32.mrf.mxu0
      %v2262 = vadd.f32 %v2249, %v2261
      %v2263 = vpop.f32.mrf.mxu0
      %2264 = vdwg.mxu0
      %2265 = vmatpush.bf16.msra.mxu0 %v1819
      %2266 = vmatpush.bf16.msra.mxu0 %v1815
      %2267 = vmatpush.bf16.msra.mxu0 %v1811
      %2268 = vmatpush.bf16.msra.mxu0 %v1807
      %2269 = vmatpush.bf16.msra.mxu0 %v1803
      %2270 = vmatpush.bf16.msra.mxu0 %v1799
      %2271 = vmatpush.bf16.msra.mxu0 %v1795
      %2272 = vmatpush.bf16.msra.mxu0 %v1791
      %2273 = vmatmul.bf16.gmra.mxu0 %v687
      %v2274 = vpop.f32.mrf.mxu0
      %v2275 = vadd.f32 %v2262, %v2274
      %v2276 = vpop.f32.mrf.mxu0
      %2277 = vdwg.mxu0
      %2278 = vmatpush.bf16.msra.mxu0 %v1851
      %2279 = vmatpush.bf16.msra.mxu0 %v1847
      %2280 = vmatpush.bf16.msra.mxu0 %v1843
      %2281 = vmatpush.bf16.msra.mxu0 %v1839
      %2282 = vmatpush.bf16.msra.mxu0 %v1835
      %2283 = vmatpush.bf16.msra.mxu0 %v1831
      %2284 = vmatpush.bf16.msra.mxu0 %v1827
      %2285 = vmatpush.bf16.msra.mxu0 %v1823
      %2286 = vmatmul.bf16.gmra.mxu0 %v688
      %v2287 = vpop.f32.mrf.mxu0
      %v2288 = vadd.f32 %v2275, %v2287
      %v2289 = vpop.f32.mrf.mxu0
      %2290 = vdwg.mxu0
      %2291 = vmatpush.bf16.msra.mxu0 %v1883
      %2292 = vmatpush.bf16.msra.mxu0 %v1879
      %2293 = vmatpush.bf16.msra.mxu0 %v1875
      %2294 = vmatpush.bf16.msra.mxu0 %v1871
      %2295 = vmatpush.bf16.msra.mxu0 %v1867
      %2296 = vmatpush.bf16.msra.mxu0 %v1863
      %2297 = vmatpush.bf16.msra.mxu0 %v1859
      %2298 = vmatpush.bf16.msra.mxu0 %v1855
      %2299 = vmatmul.bf16.gmra.mxu0 %v689
      %v2300 = vpop.f32.mrf.mxu0
      %v2301 = vadd.f32 %v2288, %v2300
      %v2302 = vpop.f32.mrf.mxu0
      %2303 = vdwg.mxu0
      %2304 = vmatpush.bf16.msra.mxu0 %v1915
      %2305 = vmatpush.bf16.msra.mxu0 %v1911
      %2306 = vmatpush.bf16.msra.mxu0 %v1907
      %2307 = vmatpush.bf16.msra.mxu0 %v1903
      %2308 = vmatpush.bf16.msra.mxu0 %v1899
      %2309 = vmatpush.bf16.msra.mxu0 %v1895
      %2310 = vmatpush.bf16.msra.mxu0 %v1891
      %2311 = vmatpush.bf16.msra.mxu0 %v1887
      %2312 = vmatmul.bf16.gmra.mxu0 %v690
      %v2313 = vpop.f32.mrf.mxu0
      %v2314 = vadd.f32 %v2301, %v2313
      %v2315 = vpop.f32.mrf.mxu0
      %2316 = vdwg.mxu0
      %2317 = vmatpush.bf16.msra.mxu0 %v1947
      %2318 = vmatpush.bf16.msra.mxu0 %v1943
      %2319 = vmatpush.bf16.msra.mxu0 %v1939
      %2320 = vmatpush.bf16.msra.mxu0 %v1935
      %2321 = vmatpush.bf16.msra.mxu0 %v1931
      %2322 = vmatpush.bf16.msra.mxu0 %v1927
      %2323 = vmatpush.bf16.msra.mxu0 %v1923
      %2324 = vmatpush.bf16.msra.mxu0 %v1919
      %2325 = vmatmul.bf16.gmra.mxu0 %v691
      %v2326 = vpop.f32.mrf.mxu0
      %v2327 = vadd.f32 %v2314, %v2326
      %v2328 = vpop.f32.mrf.mxu0
      %2329 = vdwg.mxu0
      %2330 = vmatpush.bf16.msra.mxu0 %v1979
      %2331 = vmatpush.bf16.msra.mxu0 %v1975
      %2332 = vmatpush.bf16.msra.mxu0 %v1971
      %2333 = vmatpush.bf16.msra.mxu0 %v1967
      %2334 = vmatpush.bf16.msra.mxu0 %v1963
      %2335 = vmatpush.bf16.msra.mxu0 %v1959
      %2336 = vmatpush.bf16.msra.mxu0 %v1955
      %2337 = vmatpush.bf16.msra.mxu0 %v1951
      %2338 = vmatmul.bf16.gmra.mxu0 %v692
      %v2339 = vpop.f32.mrf.mxu0
      %v2340 = vadd.f32 %v2327, %v2339
      %v2341 = vpop.f32.mrf.mxu0
      %2342 = vdwg.mxu0
      %2343 = vmatpush.bf16.msra.mxu0 %v1756
      %2344 = vmatpush.bf16.msra.mxu0 %v1752
      %2345 = vmatpush.bf16.msra.mxu0 %v1748
      %2346 = vmatpush.bf16.msra.mxu0 %v1744
      %2347 = vmatpush.bf16.msra.mxu0 %v1740
      %2348 = vmatpush.bf16.msra.mxu0 %v1736
      %2349 = vmatpush.bf16.msra.mxu0 %v1732
      %2350 = vmatpush.bf16.msra.mxu0 %v1728
      %2351 = vmatmul.bf16.gmra.mxu0 %v685
      %v2352 = vpop.f32.mrf.mxu0
      %v2353 = vadd.f32 %v952, %v2352
      %v2354 = vpop.f32.mrf.mxu0
      %2355 = vdwg.mxu0
      %2356 = vmatpush.bf16.msra.mxu0 %v1788
      %2357 = vmatpush.bf16.msra.mxu0 %v1784
      %2358 = vmatpush.bf16.msra.mxu0 %v1780
      %2359 = vmatpush.bf16.msra.mxu0 %v1776
      %2360 = vmatpush.bf16.msra.mxu0 %v1772
      %2361 = vmatpush.bf16.msra.mxu0 %v1768
      %2362 = vmatpush.bf16.msra.mxu0 %v1764
      %2363 = vmatpush.bf16.msra.mxu0 %v1760
      %2364 = vmatmul.bf16.gmra.mxu0 %v686
      %v2365 = vpop.f32.mrf.mxu0
      %v2366 = vadd.f32 %v2353, %v2365
      %v2367 = vpop.f32.mrf.mxu0
      %2368 = vdwg.mxu0
      %2369 = vmatpush.bf16.msra.mxu0 %v1820
      %2370 = vmatpush.bf16.msra.mxu0 %v1816
      %2371 = vmatpush.bf16.msra.mxu0 %v1812
      %2372 = vmatpush.bf16.msra.mxu0 %v1808
      %2373 = vmatpush.bf16.msra.mxu0 %v1804
      %2374 = vmatpush.bf16.msra.mxu0 %v1800
      %2375 = vmatpush.bf16.msra.mxu0 %v1796
      %2376 = vmatpush.bf16.msra.mxu0 %v1792
      %2377 = vmatmul.bf16.gmra.mxu0 %v687
      %v2378 = vpop.f32.mrf.mxu0
      %v2379 = vadd.f32 %v2366, %v2378
      %v2380 = vpop.f32.mrf.mxu0
      %2381 = vdwg.mxu0
      %2382 = vmatpush.bf16.msra.mxu0 %v1852
      %2383 = vmatpush.bf16.msra.mxu0 %v1848
      %2384 = vmatpush.bf16.msra.mxu0 %v1844
      %2385 = vmatpush.bf16.msra.mxu0 %v1840
      %2386 = vmatpush.bf16.msra.mxu0 %v1836
      %2387 = vmatpush.bf16.msra.mxu0 %v1832
      %2388 = vmatpush.bf16.msra.mxu0 %v1828
      %2389 = vmatpush.bf16.msra.mxu0 %v1824
      %2390 = vmatmul.bf16.gmra.mxu0 %v688
      %v2391 = vpop.f32.mrf.mxu0
      %v2392 = vadd.f32 %v2379, %v2391
      %v2393 = vpop.f32.mrf.mxu0
      %2394 = vdwg.mxu0
      %2395 = vmatpush.bf16.msra.mxu0 %v1884
      %2396 = vmatpush.bf16.msra.mxu0 %v1880
      %2397 = vmatpush.bf16.msra.mxu0 %v1876
      %2398 = vmatpush.bf16.msra.mxu0 %v1872
      %2399 = vmatpush.bf16.msra.mxu0 %v1868
      %2400 = vmatpush.bf16.msra.mxu0 %v1864
      %2401 = vmatpush.bf16.msra.mxu0 %v1860
      %2402 = vmatpush.bf16.msra.mxu0 %v1856
      %2403 = vmatmul.bf16.gmra.mxu0 %v689
      %v2404 = vpop.f32.mrf.mxu0
      %v2405 = vadd.f32 %v2392, %v2404
      %v2406 = vpop.f32.mrf.mxu0
      %2407 = vdwg.mxu0
      %2408 = vmatpush.bf16.msra.mxu0 %v1916
      %2409 = vmatpush.bf16.msra.mxu0 %v1912
      %2410 = vmatpush.bf16.msra.mxu0 %v1908
      %2411 = vmatpush.bf16.msra.mxu0 %v1904
      %2412 = vmatpush.bf16.msra.mxu0 %v1900
      %2413 = vmatpush.bf16.msra.mxu0 %v1896
      %2414 = vmatpush.bf16.msra.mxu0 %v1892
      %2415 = vmatpush.bf16.msra.mxu0 %v1888
      %2416 = vmatmul.bf16.gmra.mxu0 %v690
      %v2417 = vpop.f32.mrf.mxu0
      %v2418 = vadd.f32 %v2405, %v2417
      %v2419 = vpop.f32.mrf.mxu0
      %2420 = vdwg.mxu0
      %2421 = vmatpush.bf16.msra.mxu0 %v1948
      %2422 = vmatpush.bf16.msra.mxu0 %v1944
      %2423 = vmatpush.bf16.msra.mxu0 %v1940
      %2424 = vmatpush.bf16.msra.mxu0 %v1936
      %2425 = vmatpush.bf16.msra.mxu0 %v1932
      %2426 = vmatpush.bf16.msra.mxu0 %v1928
      %2427 = vmatpush.bf16.msra.mxu0 %v1924
      %2428 = vmatpush.bf16.msra.mxu0 %v1920
      %2429 = vmatmul.bf16.gmra.mxu0 %v691
      %v2430 = vpop.f32.mrf.mxu0
      %v2431 = vadd.f32 %v2418, %v2430
      %v2432 = vpop.f32.mrf.mxu0
      %2433 = vdwg.mxu0
      %2434 = vmatpush.bf16.msra.mxu0 %v1980
      %2435 = vmatpush.bf16.msra.mxu0 %v1976
      %2436 = vmatpush.bf16.msra.mxu0 %v1972
      %2437 = vmatpush.bf16.msra.mxu0 %v1968
      %2438 = vmatpush.bf16.msra.mxu0 %v1964
      %2439 = vmatpush.bf16.msra.mxu0 %v1960
      %2440 = vmatpush.bf16.msra.mxu0 %v1956
      %2441 = vmatpush.bf16.msra.mxu0 %v1952
      %2442 = vmatmul.bf16.gmra.mxu0 %v692
      %v2443 = vpop.f32.mrf.mxu0
      %v2444 = vadd.f32 %v2431, %v2443
      %v2445 = vpop.f32.mrf.mxu0
      %2446 = vdwg.mxu0
      %2447 = vmatpush.bf16.msra.mxu0 %v1757
      %2448 = vmatpush.bf16.msra.mxu0 %v1753
      %2449 = vmatpush.bf16.msra.mxu0 %v1749
      %2450 = vmatpush.bf16.msra.mxu0 %v1745
      %2451 = vmatpush.bf16.msra.mxu0 %v1741
      %2452 = vmatpush.bf16.msra.mxu0 %v1737
      %2453 = vmatpush.bf16.msra.mxu0 %v1733
      %2454 = vmatpush.bf16.msra.mxu0 %v1729
      %2455 = vmatmul.bf16.gmra.mxu0 %v685
      %v2456 = vpop.f32.mrf.mxu0
      %v2457 = vadd.f32 %v953, %v2456
      %v2458 = vpop.f32.mrf.mxu0
      %2459 = vdwg.mxu0
      %2460 = vmatpush.bf16.msra.mxu0 %v1789
      %2461 = vmatpush.bf16.msra.mxu0 %v1785
      %2462 = vmatpush.bf16.msra.mxu0 %v1781
      %2463 = vmatpush.bf16.msra.mxu0 %v1777
      %2464 = vmatpush.bf16.msra.mxu0 %v1773
      %2465 = vmatpush.bf16.msra.mxu0 %v1769
      %2466 = vmatpush.bf16.msra.mxu0 %v1765
      %2467 = vmatpush.bf16.msra.mxu0 %v1761
      %2468 = vmatmul.bf16.gmra.mxu0 %v686
      %v2469 = vpop.f32.mrf.mxu0
      %v2470 = vadd.f32 %v2457, %v2469
      %v2471 = vpop.f32.mrf.mxu0
      %2472 = vdwg.mxu0
      %2473 = vmatpush.bf16.msra.mxu0 %v1821
      %2474 = vmatpush.bf16.msra.mxu0 %v1817
      %2475 = vmatpush.bf16.msra.mxu0 %v1813
      %2476 = vmatpush.bf16.msra.mxu0 %v1809
      %2477 = vmatpush.bf16.msra.mxu0 %v1805
      %2478 = vmatpush.bf16.msra.mxu0 %v1801
      %2479 = vmatpush.bf16.msra.mxu0 %v1797
      %2480 = vmatpush.bf16.msra.mxu0 %v1793
      %2481 = vmatmul.bf16.gmra.mxu0 %v687
      %v2482 = vpop.f32.mrf.mxu0
      %v2483 = vadd.f32 %v2470, %v2482
      %v2484 = vpop.f32.mrf.mxu0
      %2485 = vdwg.mxu0
      %2486 = vmatpush.bf16.msra.mxu0 %v1853
      %2487 = vmatpush.bf16.msra.mxu0 %v1849
      %2488 = vmatpush.bf16.msra.mxu0 %v1845
      %2489 = vmatpush.bf16.msra.mxu0 %v1841
      %2490 = vmatpush.bf16.msra.mxu0 %v1837
      %2491 = vmatpush.bf16.msra.mxu0 %v1833
      %2492 = vmatpush.bf16.msra.mxu0 %v1829
      %2493 = vmatpush.bf16.msra.mxu0 %v1825
      %2494 = vmatmul.bf16.gmra.mxu0 %v688
      %v2495 = vpop.f32.mrf.mxu0
      %v2496 = vadd.f32 %v2483, %v2495
      %v2497 = vpop.f32.mrf.mxu0
      %2498 = vdwg.mxu0
      %2499 = vmatpush.bf16.msra.mxu0 %v1885
      %2500 = vmatpush.bf16.msra.mxu0 %v1881
      %2501 = vmatpush.bf16.msra.mxu0 %v1877
      %2502 = vmatpush.bf16.msra.mxu0 %v1873
      %2503 = vmatpush.bf16.msra.mxu0 %v1869
      %2504 = vmatpush.bf16.msra.mxu0 %v1865
      %2505 = vmatpush.bf16.msra.mxu0 %v1861
      %2506 = vmatpush.bf16.msra.mxu0 %v1857
      %2507 = vmatmul.bf16.gmra.mxu0 %v689
      %v2508 = vpop.f32.mrf.mxu0
      %v2509 = vadd.f32 %v2496, %v2508
      %v2510 = vpop.f32.mrf.mxu0
      %2511 = vdwg.mxu0
      %2512 = vmatpush.bf16.msra.mxu0 %v1917
      %2513 = vmatpush.bf16.msra.mxu0 %v1913
      %2514 = vmatpush.bf16.msra.mxu0 %v1909
      %2515 = vmatpush.bf16.msra.mxu0 %v1905
      %2516 = vmatpush.bf16.msra.mxu0 %v1901
      %2517 = vmatpush.bf16.msra.mxu0 %v1897
      %2518 = vmatpush.bf16.msra.mxu0 %v1893
      %2519 = vmatpush.bf16.msra.mxu0 %v1889
      %2520 = vmatmul.bf16.gmra.mxu0 %v690
      %v2521 = vpop.f32.mrf.mxu0
      %v2522 = vadd.f32 %v2509, %v2521
      %v2523 = vpop.f32.mrf.mxu0
      %2524 = vdwg.mxu0
      %2525 = vmatpush.bf16.msra.mxu0 %v1949
      %2526 = vmatpush.bf16.msra.mxu0 %v1945
      %2527 = vmatpush.bf16.msra.mxu0 %v1941
      %2528 = vmatpush.bf16.msra.mxu0 %v1937
      %2529 = vmatpush.bf16.msra.mxu0 %v1933
      %2530 = vmatpush.bf16.msra.mxu0 %v1929
      %2531 = vmatpush.bf16.msra.mxu0 %v1925
      %2532 = vmatpush.bf16.msra.mxu0 %v1921
      %2533 = vmatmul.bf16.gmra.mxu0 %v691
      %v2534 = vpop.f32.mrf.mxu0
      %v2535 = vadd.f32 %v2522, %v2534
      %v2536 = vpop.f32.mrf.mxu0
      %2537 = vdwg.mxu0
      %2538 = vmatpush.bf16.msra.mxu0 %v1981
      %2539 = vmatpush.bf16.msra.mxu0 %v1977
      %2540 = vmatpush.bf16.msra.mxu0 %v1973
      %2541 = vmatpush.bf16.msra.mxu0 %v1969
      %2542 = vmatpush.bf16.msra.mxu0 %v1965
      %2543 = vmatpush.bf16.msra.mxu0 %v1961
      %2544 = vmatpush.bf16.msra.mxu0 %v1957
      %2545 = vmatpush.bf16.msra.mxu0 %v1953
      %2546 = vmatmul.bf16.gmra.mxu0 %v692
      %v2547 = vpop.f32.mrf.mxu0
      %v2548 = vadd.f32 %v2535, %v2547
      %v2549 = vpop.f32.mrf.mxu0
      %2550 = vdwg.mxu0
      %2551 = vmatpush.bf16.msra.mxu0 %v1758
      %2552 = vmatpush.bf16.msra.mxu0 %v1754
      %2553 = vmatpush.bf16.msra.mxu0 %v1750
      %2554 = vmatpush.bf16.msra.mxu0 %v1746
      %2555 = vmatpush.bf16.msra.mxu0 %v1742
      %2556 = vmatpush.bf16.msra.mxu0 %v1738
      %2557 = vmatpush.bf16.msra.mxu0 %v1734
      %2558 = vmatpush.bf16.msra.mxu0 %v1730
      %2559 = vmatmul.bf16.gmra.mxu0 %v685
      %v2560 = vpop.f32.mrf.mxu0
      %v2561 = vadd.f32 %v954, %v2560
      %v2562 = vpop.f32.mrf.mxu0
      %2563 = vdwg.mxu0
      %2564 = vmatpush.bf16.msra.mxu0 %v1790
      %2565 = vmatpush.bf16.msra.mxu0 %v1786
      %2566 = vmatpush.bf16.msra.mxu0 %v1782
      %2567 = vmatpush.bf16.msra.mxu0 %v1778
      %2568 = vmatpush.bf16.msra.mxu0 %v1774
      %2569 = vmatpush.bf16.msra.mxu0 %v1770
      %2570 = vmatpush.bf16.msra.mxu0 %v1766
      %2571 = vmatpush.bf16.msra.mxu0 %v1762
      %2572 = vmatmul.bf16.gmra.mxu0 %v686
      %v2573 = vpop.f32.mrf.mxu0
      %v2574 = vadd.f32 %v2561, %v2573
      %v2575 = vpop.f32.mrf.mxu0
      %2576 = vdwg.mxu0
      %2577 = vmatpush.bf16.msra.mxu0 %v1822
      %2578 = vmatpush.bf16.msra.mxu0 %v1818
      %2579 = vmatpush.bf16.msra.mxu0 %v1814
      %2580 = vmatpush.bf16.msra.mxu0 %v1810
      %2581 = vmatpush.bf16.msra.mxu0 %v1806
      %2582 = vmatpush.bf16.msra.mxu0 %v1802
      %2583 = vmatpush.bf16.msra.mxu0 %v1798
      %2584 = vmatpush.bf16.msra.mxu0 %v1794
      %2585 = vmatmul.bf16.gmra.mxu0 %v687
      %v2586 = vpop.f32.mrf.mxu0
      %v2587 = vadd.f32 %v2574, %v2586
      %v2588 = vpop.f32.mrf.mxu0
      %2589 = vdwg.mxu0
      %2590 = vmatpush.bf16.msra.mxu0 %v1854
      %2591 = vmatpush.bf16.msra.mxu0 %v1850
      %2592 = vmatpush.bf16.msra.mxu0 %v1846
      %2593 = vmatpush.bf16.msra.mxu0 %v1842
      %2594 = vmatpush.bf16.msra.mxu0 %v1838
      %2595 = vmatpush.bf16.msra.mxu0 %v1834
      %2596 = vmatpush.bf16.msra.mxu0 %v1830
      %2597 = vmatpush.bf16.msra.mxu0 %v1826
      %2598 = vmatmul.bf16.gmra.mxu0 %v688
      %v2599 = vpop.f32.mrf.mxu0
      %v2600 = vadd.f32 %v2587, %v2599
      %v2601 = vpop.f32.mrf.mxu0
      %2602 = vdwg.mxu0
      %2603 = vmatpush.bf16.msra.mxu0 %v1886
      %2604 = vmatpush.bf16.msra.mxu0 %v1882
      %2605 = vmatpush.bf16.msra.mxu0 %v1878
      %2606 = vmatpush.bf16.msra.mxu0 %v1874
      %2607 = vmatpush.bf16.msra.mxu0 %v1870
      %2608 = vmatpush.bf16.msra.mxu0 %v1866
      %2609 = vmatpush.bf16.msra.mxu0 %v1862
      %2610 = vmatpush.bf16.msra.mxu0 %v1858
      %2611 = vmatmul.bf16.gmra.mxu0 %v689
      %v2612 = vpop.f32.mrf.mxu0
      %v2613 = vadd.f32 %v2600, %v2612
      %v2614 = vpop.f32.mrf.mxu0
      %2615 = vdwg.mxu0
      %2616 = vmatpush.bf16.msra.mxu0 %v1918
      %2617 = vmatpush.bf16.msra.mxu0 %v1914
      %2618 = vmatpush.bf16.msra.mxu0 %v1910
      %2619 = vmatpush.bf16.msra.mxu0 %v1906
      %2620 = vmatpush.bf16.msra.mxu0 %v1902
      %2621 = vmatpush.bf16.msra.mxu0 %v1898
      %2622 = vmatpush.bf16.msra.mxu0 %v1894
      %2623 = vmatpush.bf16.msra.mxu0 %v1890
      %2624 = vmatmul.bf16.gmra.mxu0 %v690
      %v2625 = vpop.f32.mrf.mxu0
      %v2626 = vadd.f32 %v2613, %v2625
      %v2627 = vpop.f32.mrf.mxu0
      %2628 = vdwg.mxu0
      %2629 = vmatpush.bf16.msra.mxu0 %v1950
      %2630 = vmatpush.bf16.msra.mxu0 %v1946
      %2631 = vmatpush.bf16.msra.mxu0 %v1942
      %2632 = vmatpush.bf16.msra.mxu0 %v1938
      %2633 = vmatpush.bf16.msra.mxu0 %v1934
      %2634 = vmatpush.bf16.msra.mxu0 %v1930
      %2635 = vmatpush.bf16.msra.mxu0 %v1926
      %2636 = vmatpush.bf16.msra.mxu0 %v1922
      %2637 = vmatmul.bf16.gmra.mxu0 %v691
      %v2638 = vpop.f32.mrf.mxu0
      %v2639 = vadd.f32 %v2626, %v2638
      %v2640 = vpop.f32.mrf.mxu0
      %2641 = vdwg.mxu0
      %2642 = vmatpush.bf16.msra.mxu0 %v1982
      %2643 = vmatpush.bf16.msra.mxu0 %v1978
      %2644 = vmatpush.bf16.msra.mxu0 %v1974
      %2645 = vmatpush.bf16.msra.mxu0 %v1970
      %2646 = vmatpush.bf16.msra.mxu0 %v1966
      %2647 = vmatpush.bf16.msra.mxu0 %v1962
      %2648 = vmatpush.bf16.msra.mxu0 %v1958
      %2649 = vmatpush.bf16.msra.mxu0 %v1954
      %2650 = vmatmul.bf16.gmra.mxu0 %v692
      %v2651 = vpop.f32.mrf.mxu0
      %v2652 = vadd.f32 %v2639, %v2651
      %v2653 = vpop.f32.mrf.mxu0
      %2654 = vdwg.mxu0
      %v2655 = vmax.f32 %v2340, 0.0
      %v2656 = vmax.f32 %v2444, 0.0
      %v2657 = vmax.f32 %v2548, 0.0
      %v2658 = vmax.f32 %v2652, 0.0
      %v2659 = vpack.c.bf16 %v2655, %v2655
      %v2660 = vpack.c.bf16 %v2656, %v2656
      %v2661 = vpack.c.bf16 %v2657, %v2657
      %v2662 = vpack.c.bf16 %v2658, %v2658
      %v2663 = vld [vmem:[#allocation12] sm:$0xf]
      %v2664 = vld [vmem:[#allocation12 + $0x4] sm:$0xf]
      %v2665 = vld [vmem:[#allocation12 + $0x8] sm:$0xf]
      %v2666 = vld [vmem:[#allocation12 + $0xc] sm:$0xf]
      %v2667 = vld [vmem:[#allocation12 + $0x10] sm:$0xf]
      %v2668 = vld [vmem:[#allocation12 + $0x14] sm:$0xf]
      %v2669 = vld [vmem:[#allocation12 + $0x18] sm:$0xf]
      %v2670 = vld [vmem:[#allocation12 + $0x1c] sm:$0xf]
      %v2671 = vld [vmem:[#allocation12 + $0x20] sm:$0xf]
      %v2672 = vld [vmem:[#allocation12 + $0x24] sm:$0xf]
      %v2673 = vld [vmem:[#allocation12 + $0x28] sm:$0xf]
      %v2674 = vld [vmem:[#allocation12 + $0x2c] sm:$0xf]
      %v2675 = vld [vmem:[#allocation12 + $0x30] sm:$0xf]
      %v2676 = vld [vmem:[#allocation12 + $0x34] sm:$0xf]
      %v2677 = vld [vmem:[#allocation12 + $0x38] sm:$0xf]
      %v2678 = vld [vmem:[#allocation12 + $0x3c] sm:$0xf]
      %v2679 = vld [vmem:[#allocation12 + $0x40] sm:$0xf]
      %v2680 = vld [vmem:[#allocation12 + $0x44] sm:$0xf]
      %v2681 = vld [vmem:[#allocation12 + $0x48] sm:$0xf]
      %v2682 = vld [vmem:[#allocation12 + $0x4c] sm:$0xf]
      %v2683 = vld [vmem:[#allocation12 + $0x50] sm:$0xf]
      %v2684 = vld [vmem:[#allocation12 + $0x54] sm:$0xf]
      %v2685 = vld [vmem:[#allocation12 + $0x58] sm:$0xf]
      %v2686 = vld [vmem:[#allocation12 + $0x5c] sm:$0xf]
      %v2687 = vld [vmem:[#allocation12 + $0x60] sm:$0xf]
      %v2688 = vld [vmem:[#allocation12 + $0x64] sm:$0xf]
      %v2689 = vld [vmem:[#allocation12 + $0x68] sm:$0xf]
      %v2690 = vld [vmem:[#allocation12 + $0x6c] sm:$0xf]
      %v2691 = vld [vmem:[#allocation12 + $0x70] sm:$0xf]
      %v2692 = vld [vmem:[#allocation12 + $0x74] sm:$0xf]
      %v2693 = vld [vmem:[#allocation12 + $0x78] sm:$0xf]
      %v2694 = vld [vmem:[#allocation12 + $0x7c] sm:$0xf]
      %v2695 = vld [vmem:[#allocation12 + $0x80] sm:$0xf]
      %v2696 = vld [vmem:[#allocation12 + $0x84] sm:$0xf]
      %v2697 = vld [vmem:[#allocation12 + $0x88] sm:$0xf]
      %v2698 = vld [vmem:[#allocation12 + $0x8c] sm:$0xf]
      %v2699 = vld [vmem:[#allocation12 + $0x90] sm:$0xf]
      %v2700 = vld [vmem:[#allocation12 + $0x94] sm:$0xf]
      %v2701 = vld [vmem:[#allocation12 + $0x98] sm:$0xf]
      %v2702 = vld [vmem:[#allocation12 + $0x9c] sm:$0xf]
      %v2703 = vld [vmem:[#allocation12 + $0xa0] sm:$0xf]
      %v2704 = vld [vmem:[#allocation12 + $0xa4] sm:$0xf]
      %v2705 = vld [vmem:[#allocation12 + $0xa8] sm:$0xf]
      %v2706 = vld [vmem:[#allocation12 + $0xac] sm:$0xf]
      %v2707 = vld [vmem:[#allocation12 + $0xb0] sm:$0xf]
      %v2708 = vld [vmem:[#allocation12 + $0xb4] sm:$0xf]
      %v2709 = vld [vmem:[#allocation12 + $0xb8] sm:$0xf]
      %v2710 = vld [vmem:[#allocation12 + $0xbc] sm:$0xf]
      %v2711 = vld [vmem:[#allocation12 + $0xc0] sm:$0xf]
      %v2712 = vld [vmem:[#allocation12 + $0xc4] sm:$0xf]
      %v2713 = vld [vmem:[#allocation12 + $0xc8] sm:$0xf]
      %v2714 = vld [vmem:[#allocation12 + $0xcc] sm:$0xf]
      %v2715 = vld [vmem:[#allocation12 + $0xd0] sm:$0xf]
      %v2716 = vld [vmem:[#allocation12 + $0xd4] sm:$0xf]
      %v2717 = vld [vmem:[#allocation12 + $0xd8] sm:$0xf]
      %v2718 = vld [vmem:[#allocation12 + $0xdc] sm:$0xf]
      %v2719 = vld [vmem:[#allocation12 + $0xe0] sm:$0xf]
      %v2720 = vld [vmem:[#allocation12 + $0xe4] sm:$0xf]
      %v2721 = vld [vmem:[#allocation12 + $0xe8] sm:$0xf]
      %v2722 = vld [vmem:[#allocation12 + $0xec] sm:$0xf]
      %v2723 = vld [vmem:[#allocation12 + $0xf0] sm:$0xf]
      %v2724 = vld [vmem:[#allocation12 + $0xf4] sm:$0xf]
      %v2725 = vld [vmem:[#allocation12 + $0xf8] sm:$0xf]
      %v2726 = vld [vmem:[#allocation12 + $0xfc] sm:$0xf]
      %v2727 = vld [vmem:[%s6] sm:$0x1]
      %v2729 = vperm.slane %v2727, 0
      %v2795 = vunpack.c.l.b16 %v2663
      %v2796 = vunpack.c.l.b16 %v2664
      %v2797 = vunpack.c.l.b16 %v2665
      %v2798 = vunpack.c.l.b16 %v2666
      %v2799 = vunpack.c.l.b16 %v2667
      %v2800 = vunpack.c.l.b16 %v2668
      %v2801 = vunpack.c.l.b16 %v2669
      %v2802 = vunpack.c.l.b16 %v2670
      %v2803 = vunpack.c.l.b16 %v2671
      %v2804 = vunpack.c.l.b16 %v2672
      %v2805 = vunpack.c.l.b16 %v2673
      %v2806 = vunpack.c.l.b16 %v2674
      %v2807 = vunpack.c.l.b16 %v2675
      %v2808 = vunpack.c.l.b16 %v2676
      %v2809 = vunpack.c.l.b16 %v2677
      %v2810 = vunpack.c.l.b16 %v2678
      %v2811 = vunpack.c.l.b16 %v2679
      %v2812 = vunpack.c.l.b16 %v2680
      %v2813 = vunpack.c.l.b16 %v2681
      %v2814 = vunpack.c.l.b16 %v2682
      %v2815 = vunpack.c.l.b16 %v2683
      %v2816 = vunpack.c.l.b16 %v2684
      %v2817 = vunpack.c.l.b16 %v2685
      %v2818 = vunpack.c.l.b16 %v2686
      %v2819 = vunpack.c.l.b16 %v2687
      %v2820 = vunpack.c.l.b16 %v2688
      %v2821 = vunpack.c.l.b16 %v2689
      %v2822 = vunpack.c.l.b16 %v2690
      %v2823 = vunpack.c.l.b16 %v2691
      %v2824 = vunpack.c.l.b16 %v2692
      %v2825 = vunpack.c.l.b16 %v2693
      %v2826 = vunpack.c.l.b16 %v2694
      %v2827 = vunpack.c.l.b16 %v2695
      %v2828 = vunpack.c.l.b16 %v2696
      %v2829 = vunpack.c.l.b16 %v2697
      %v2830 = vunpack.c.l.b16 %v2698
      %v2831 = vunpack.c.l.b16 %v2699
      %v2832 = vunpack.c.l.b16 %v2700
      %v2833 = vunpack.c.l.b16 %v2701
      %v2834 = vunpack.c.l.b16 %v2702
      %v2835 = vunpack.c.l.b16 %v2703
      %v2836 = vunpack.c.l.b16 %v2704
      %v2837 = vunpack.c.l.b16 %v2705
      %v2838 = vunpack.c.l.b16 %v2706
      %v2839 = vunpack.c.l.b16 %v2707
      %v2840 = vunpack.c.l.b16 %v2708
      %v2841 = vunpack.c.l.b16 %v2709
      %v2842 = vunpack.c.l.b16 %v2710
      %v2843 = vunpack.c.l.b16 %v2711
      %v2844 = vunpack.c.l.b16 %v2712
      %v2845 = vunpack.c.l.b16 %v2713
      %v2846 = vunpack.c.l.b16 %v2714
      %v2847 = vunpack.c.l.b16 %v2715
      %v2848 = vunpack.c.l.b16 %v2716
      %v2849 = vunpack.c.l.b16 %v2717
      %v2850 = vunpack.c.l.b16 %v2718
      %v2851 = vunpack.c.l.b16 %v2719
      %v2852 = vunpack.c.l.b16 %v2720
      %v2853 = vunpack.c.l.b16 %v2721
      %v2854 = vunpack.c.l.b16 %v2722
      %v2855 = vunpack.c.l.b16 %v2723
      %v2856 = vunpack.c.l.b16 %v2724
      %v2857 = vunpack.c.l.b16 %v2725
      %v2858 = vunpack.c.l.b16 %v2726
      %v2859 = vpack.c.b16 %v2796, %v2795
      %v2860 = vpack.c.b16 %v2798, %v2797
      %v2861 = vpack.c.b16 %v2800, %v2799
      %v2862 = vpack.c.b16 %v2802, %v2801
      %v2863 = vpack.c.b16 %v2804, %v2803
      %v2864 = vpack.c.b16 %v2806, %v2805
      %v2865 = vpack.c.b16 %v2808, %v2807
      %v2866 = vpack.c.b16 %v2810, %v2809
      %v2867 = vpack.c.b16 %v2812, %v2811
      %v2868 = vpack.c.b16 %v2814, %v2813
      %v2869 = vpack.c.b16 %v2816, %v2815
      %v2870 = vpack.c.b16 %v2818, %v2817
      %v2871 = vpack.c.b16 %v2820, %v2819
      %v2872 = vpack.c.b16 %v2822, %v2821
      %v2873 = vpack.c.b16 %v2824, %v2823
      %v2874 = vpack.c.b16 %v2826, %v2825
      %v2875 = vpack.c.b16 %v2828, %v2827
      %v2876 = vpack.c.b16 %v2830, %v2829
      %v2877 = vpack.c.b16 %v2832, %v2831
      %v2878 = vpack.c.b16 %v2834, %v2833
      %v2879 = vpack.c.b16 %v2836, %v2835
      %v2880 = vpack.c.b16 %v2838, %v2837
      %v2881 = vpack.c.b16 %v2840, %v2839
      %v2882 = vpack.c.b16 %v2842, %v2841
      %v2883 = vpack.c.b16 %v2844, %v2843
      %v2884 = vpack.c.b16 %v2846, %v2845
      %v2885 = vpack.c.b16 %v2848, %v2847
      %v2886 = vpack.c.b16 %v2850, %v2849
      %v2887 = vpack.c.b16 %v2852, %v2851
      %v2888 = vpack.c.b16 %v2854, %v2853
      %v2889 = vpack.c.b16 %v2856, %v2855
      %v2890 = vpack.c.b16 %v2858, %v2857
      %2923 = vmatpush.bf16.msra.mxu0 %v2866
      %2924 = vmatpush.bf16.msra.mxu0 %v2865
      %2925 = vmatpush.bf16.msra.mxu0 %v2864
      %2926 = vmatpush.bf16.msra.mxu0 %v2863
      %2927 = vmatpush.bf16.msra.mxu0 %v2862
      %2928 = vmatpush.bf16.msra.mxu0 %v2861
      %2929 = vmatpush.bf16.msra.mxu0 %v2860
      %2930 = vmatpush.bf16.msra.mxu0 %v2859
      %2931 = vmatmul.bf16.gmra.mxu0 %v2659
      %v2932 = vpop.f32.mrf.mxu0
      %v2933 = vadd.f32 %v2729, %v2932
      %v2934 = vpop.f32.mrf.mxu0
      %2935 = vdwg.mxu0
      %2936 = vmatpush.bf16.msra.mxu0 %v2874
      %2937 = vmatpush.bf16.msra.mxu0 %v2873
      %2938 = vmatpush.bf16.msra.mxu0 %v2872
      %2939 = vmatpush.bf16.msra.mxu0 %v2871
      %2940 = vmatpush.bf16.msra.mxu0 %v2870
      %2941 = vmatpush.bf16.msra.mxu0 %v2869
      %2942 = vmatpush.bf16.msra.mxu0 %v2868
      %2943 = vmatpush.bf16.msra.mxu0 %v2867
      %2944 = vmatmul.bf16.gmra.mxu0 %v2660
      %v2945 = vpop.f32.mrf.mxu0
      %v2946 = vadd.f32 %v2933, %v2945
      %v2947 = vpop.f32.mrf.mxu0
      %2948 = vdwg.mxu0
      %2949 = vmatpush.bf16.msra.mxu0 %v2882
      %2950 = vmatpush.bf16.msra.mxu0 %v2881
      %2951 = vmatpush.bf16.msra.mxu0 %v2880
      %2952 = vmatpush.bf16.msra.mxu0 %v2879
      %2953 = vmatpush.bf16.msra.mxu0 %v2878
      %2954 = vmatpush.bf16.msra.mxu0 %v2877
      %2955 = vmatpush.bf16.msra.mxu0 %v2876
      %2956 = vmatpush.bf16.msra.mxu0 %v2875
      %2957 = vmatmul.bf16.gmra.mxu0 %v2661
      %v2958 = vpop.f32.mrf.mxu0
      %v2959 = vadd.f32 %v2946, %v2958
      %v2960 = vpop.f32.mrf.mxu0
      %2961 = vdwg.mxu0
      %2962 = vmatpush.bf16.msra.mxu0 %v2890
      %2963 = vmatpush.bf16.msra.mxu0 %v2889
      %2964 = vmatpush.bf16.msra.mxu0 %v2888
      %2965 = vmatpush.bf16.msra.mxu0 %v2887
      %2966 = vmatpush.bf16.msra.mxu0 %v2886
      %2967 = vmatpush.bf16.msra.mxu0 %v2885
      %2968 = vmatpush.bf16.msra.mxu0 %v2884
      %2969 = vmatpush.bf16.msra.mxu0 %v2883
      %2970 = vmatmul.bf16.gmra.mxu0 %v2662
      %v2971 = vpop.f32.mrf.mxu0
      %v2972 = vadd.f32 %v2959, %v2971
      %v2973 = vpop.f32.mrf.mxu0
      %2974 = vdwg.mxu0
      %2975 = vst [vmem:[#allocation14] sm:$0xff] %v2972
    $region61: #{tpu_custom_call.1} parent=1 // pred_fallthru
      _
    // Predicated region
    $region62: #{tpu_custom_call.1} parent=1 // pred_check
      _
    $region63: #{tpu_custom_call.1} parent=1 // pred_check_branch
      %2977 = sbr.rel (0) target = $region65
    $region64: #{tpu_custom_call.1} parent=1 // pred_region
      %2979 = vsyncadd [#allocation5], 0
      %s2981 = sshll.u32 [#allocation14], 4
      %s2982 = int_to_ptr.vmem [resolvable:$true] %s2981
      %s2983 = sshll.u32 %s7, 4
      %s2984 = int_to_ptr.hbm [resolvable:$true] %s2983
      %2986 = dma.vmem_to_hbm [thread:$0]  %s2982, 128, %s2984, [#allocation5]
    $region65: #{tpu_custom_call.1} parent=1 // pred_fallthru
      _
    // Predicated region
    $region66: #{tpu_custom_call.1} parent=1 // pred_check
      _
    $region67: #{tpu_custom_call.1} parent=1 // pred_check_branch
      %2988 = sbr.rel (0) target = $region69
    $region68: #{tpu_custom_call.1} parent=1 // pred_region
      %2990 = dma.done [#allocation5], 128
    $region69: #{tpu_custom_call.1} parent=1 // pred_fallthru
      _
    %2991 = vsyncpa [#allocation4], 1
    %2992 = vsyncpa [#allocation7], 1
    %2993 = vsyncpa [#allocation10], 1
    %2994 = vsyncpa [#allocation13], 1
    %2995 = vsyncpa [#allocation5], 1

</llo_original>
